<compile_context>
chip_gen: v7x
topology: tpu7x:2x2x1
jax: 0.10.0
libtpu: 0.0.40
codegen_flags: <defaults>
</compile_context>

<pallas_src>
import functools

import jax
import jax.numpy as jnp
from jax.experimental import pallas as pl
from jax.experimental.pallas import tpu as pltpu


def _leaky_relu(v, slope=0.05):
    return jnp.where(v >= 0, v, slope * v)


def mlp_kernel(x_ref, w1_ref, b1_ref, w2_ref, b2_ref, w3_ref, b3_ref,
               w4_ref, b4_ref, o_ref):
    wdt = w1_ref.dtype  # MXU operand dtype: bf16 on the fast path, f32 on the exact path
    # Lin1 (+Dropout: identity in eval) + LeakyReLU(0.05).
    # x is cast in-kernel so the HBM->VMEM stream over x is a single f32 pass.
    h = jnp.dot(x_ref[...].astype(wdt), w1_ref[...],
                preferred_element_type=jnp.float32) + b1_ref[...]
    h = _leaky_relu(h)
    # Lin2 (+Dropout: identity in eval) + LeakyReLU(0.05)
    h = jnp.dot(h.astype(wdt), w2_ref[...],
                preferred_element_type=jnp.float32) + b2_ref[...]
    h = _leaky_relu(h)
    # Lin3 + LeakyReLU(0.05)
    h = jnp.dot(h.astype(wdt), w3_ref[...],
                preferred_element_type=jnp.float32) + b3_ref[...]
    h = _leaky_relu(h)
    # Lin4 (no activation)
    h = jnp.dot(h.astype(wdt), w4_ref[...],
                preferred_element_type=jnp.float32) + b4_ref[...]
    o_ref[...] = h.astype(o_ref.dtype)


@functools.partial(jax.jit, static_argnames=("block_rows", "use_bf16"))
def fully_connect_modul_300_forward(x, params, *, block_rows=8192, use_bf16=True):
    """x: [B, Size[0]] float32. params: w1..w4 stored as [in, out], b1..b4 as [1, out].

    block_rows: logical-batch tile height (8192 logical rows == 1024 packed rows ==
    ~1 MiB of f32 x per tile). Per-step VMEM stays ~10-13 MiB at the default, under
    the 32 MiB limit requested below on every generation (v5e/v6e/v7x).
    """
    PACK = 8
    B, in_dim = x.shape
    out_dim = params["w4"].shape[1]
    out_dtype = x.dtype

    # Pad batch to a multiple of PACK (rows are independent; padded rows are dropped).
    B_pad = ((B + PACK - 1) // PACK) * PACK
    if B_pad != B:
        x = jnp.pad(x, ((0, B_pad - B), (0, 0)))
    Bp = B_pad // PACK

    # Row-packed view of x: byte-identical row-major reshape (free in XLA).
    x_packed = x.reshape(Bp, PACK * in_dim)

    # Block-diagonal weight expansion: kron(I_8, W). In the packed layout,
    # packed_x @ kron(I_8, W) + tile(b, 8) reproduces the per-row x @ W + b exactly.
    compute_dtype = jnp.bfloat16 if use_bf16 else x.dtype
    eye = jnp.eye(PACK, dtype=jnp.float32)
    ws = [jnp.kron(eye, params[f"w{i}"]).astype(compute_dtype) for i in range(1, 5)]
    bs = [jnp.tile(params[f"b{i}"], (1, PACK)).astype(jnp.float32) for i in range(1, 5)]

    # Packed-row tile height.
    tb = max(1, min(block_rows // PACK, Bp))
    if Bp >= 16:
        # Give the "parallel" batch axis >= 2 tiles so both v7x TensorCores get work.
        tb = min(tb, ((pl.cdiv(Bp, 2) + 7) // 8) * 8)
    if tb < Bp:
        # Partial blocks must have a sublane-multiple (8) tile height.
        tb = max(8, (tb // 8) * 8)
        if tb >= Bp:
            tb = Bp
    grid = (pl.cdiv(Bp, tb),)
    # If tb does not divide Bp, the last tile reads padded/garbage rows and its
    # out-of-range writes are dropped — harmless because rows are independent.

    row_map = lambda i: (i, 0)     # marches over packed batch tiles
    const_map = lambda i: (0, 0)   # weights/biases: same block every step -> VMEM resident

    in_specs = [pl.BlockSpec((tb, PACK * in_dim), row_map)]
    args = [x_packed]
    for w, b in zip(ws, bs):
        in_specs.append(pl.BlockSpec(w.shape, const_map))
        in_specs.append(pl.BlockSpec(b.shape, const_map))
        args += [w, b]

    flops = 2 * Bp * sum(int(w.shape[0]) * int(w.shape[1]) for w in ws)
    bytes_accessed = (
        B_pad * in_dim * x.dtype.itemsize
        + B_pad * out_dim * jnp.dtype(out_dtype).itemsize
        + sum(int(w.size) * w.dtype.itemsize for w in ws)
        + sum(int(b.size) * b.dtype.itemsize for b in bs))

    out_packed = pl.pallas_call(
        mlp_kernel,
        out_shape=jax.ShapeDtypeStruct((Bp, PACK * out_dim), out_dtype),
        grid=grid,
        in_specs=in_specs,
        out_specs=pl.BlockSpec((tb, PACK * out_dim), row_map),
        compiler_params=pltpu.CompilerParams(
            dimension_semantics=("parallel",),      # megacore shard of batch tiles on v7x
            vmem_limit_bytes=32 * 1024 * 1024),     # raise v5e's 16 MiB scoped default
        cost_estimate=pl.CostEstimate(flops=flops, transcendentals=0,
                                      bytes_accessed=bytes_accessed),
    )(*args)

    # Unpack: (Bp, 8*out) row-major is byte-identical to (B_pad, out); drop padded rows.
    out = out_packed.reshape(B_pad, out_dim)
    return out[:B] if B_pad != B else out


def init_params(key, size):
    """Deterministic init mirroring reset_parameters():
    weight ~ U(-1/sqrt(weight.size()[0]), +...) = U(-1/sqrt(out_features), ...), bias = 0
    (matches the module's quirk of using out_features rather than fan_in).
    PyTorch Linear weights are [out, in]; stored here pre-transposed as [in, out]."""
    params = {}
    keys = jax.random.split(key, 4)
    for i in range(4):
        fan_in_dim, fan_out_dim = size[i], size[i + 1]
        lim = 1.0 / jnp.sqrt(jnp.float32(fan_out_dim))
        w = jax.random.uniform(keys[i], (fan_in_dim, fan_out_dim),
                               minval=-lim, maxval=lim, dtype=jnp.float32)
        b = jnp.zeros((1, fan_out_dim), dtype=jnp.float32)
        params[f"w{i+1}"] = w
        params[f"b{i+1}"] = b
    return params


def reference_forward(x, params):
    def lrelu(v):
        return jnp.where(v >= 0, v, 0.05 * v)
    h = lrelu(x @ params["w1"] + params["b1"])
    h = lrelu(h @ params["w2"] + params["b2"])
    h = lrelu(h @ params["w3"] + params["b3"])
    return h @ params["w4"] + params["b4"]


if __name__ == "__main__":
    # Small shapes consistent with the module: Size = (in, h1, h2, h3, out)
    Size = (32, 64, 48, 32, 16)

    key = jax.random.PRNGKey(0)
    k_x, k_p, k_x2 = jax.random.split(key, 3)
    params = init_params(k_p, Size)

    # Case 1: small batch (single grid step). Exact f32 path, then bf16 fast path.
    x = jax.random.normal(k_x, (16, Size[0]), dtype=jnp.float32)
    ref = reference_forward(x, params)

    out_f32 = jax.block_until_ready(
        fully_connect_modul_300_forward(x, params, use_bf16=False))
    assert out_f32.shape == (16, Size[4])
    assert jnp.allclose(out_f32, ref, atol=1e-4, rtol=1e-4), "f32 path mismatch vs reference"

    out_bf16 = jax.block_until_ready(
        fully_connect_modul_300_forward(x, params, use_bf16=True))
    assert out_bf16.shape == (16, Size[4])
    assert jnp.allclose(out_bf16, ref, atol=5e-3, rtol=5e-2), "bf16 path mismatch vs reference"

    # Case 2: batch not a multiple of 8 + small block_rows -> padding + multi-step ragged grid.
    x2 = jax.random.normal(k_x2, (141, Size[0]), dtype=jnp.float32)
    ref2 = reference_forward(x2, params)
    out2 = jax.block_until_ready(
        fully_connect_modul_300_forward(x2, params, block_rows=64, use_bf16=False))
    assert out2.shape == (141, Size[4])
    assert jnp.allclose(out2, ref2, atol=1e-4, rtol=1e-4), "ragged-grid path mismatch"

    # TODO(synk): Dropout(0.1) is modeled as identity (eval-mode inference); training-mode
    # dropout would need pltpu.prng_random_bits masking inside the kernel. BatchNorm1d(256)
    # exists on the module but is never used in forward(), so it is not implemented.
    print("KERNEL_OK")
</pallas_src>

<mosaic_0001>
module attributes {stable_mosaic.version = 11 : i64} {
  func.func @mlp_kernel(%arg0: i32, %arg1: memref<2x256xf32, #tpu.memory_space<vmem>>, %arg2: memref<256x512xf32, #tpu.memory_space<vmem>>, %arg3: memref<1x512xf32, #tpu.memory_space<vmem>>, %arg4: memref<512x384xf32, #tpu.memory_space<vmem>>, %arg5: memref<1x384xf32, #tpu.memory_space<vmem>>, %arg6: memref<384x256xf32, #tpu.memory_space<vmem>>, %arg7: memref<1x256xf32, #tpu.memory_space<vmem>>, %arg8: memref<256x128xf32, #tpu.memory_space<vmem>>, %arg9: memref<1x128xf32, #tpu.memory_space<vmem>>, %arg10: memref<2x128xf32, #tpu.memory_space<vmem>>) attributes {dimension_semantics = [#tpu.dimension_semantics<parallel>], iteration_bounds = array<i64: 1>, scalar_prefetch = 0 : i64, scratch_operands = 0 : i64, tpu.core_type = #tpu.core_type<tc>, window_params = [{transform_indices = @transform_0, window_bounds = array<i64: 2, 256>}, {pipeline_mode = #tpu.pipeline_mode<synchronous>, transform_indices = @transform_1, window_bounds = array<i64: 256, 512>}, {pipeline_mode = #tpu.pipeline_mode<synchronous>, transform_indices = @transform_2, window_bounds = array<i64: 1, 512>}, {pipeline_mode = #tpu.pipeline_mode<synchronous>, transform_indices = @transform_3, window_bounds = array<i64: 512, 384>}, {pipeline_mode = #tpu.pipeline_mode<synchronous>, transform_indices = @transform_4, window_bounds = array<i64: 1, 384>}, {pipeline_mode = #tpu.pipeline_mode<synchronous>, transform_indices = @transform_5, window_bounds = array<i64: 384, 256>}, {pipeline_mode = #tpu.pipeline_mode<synchronous>, transform_indices = @transform_6, window_bounds = array<i64: 1, 256>}, {pipeline_mode = #tpu.pipeline_mode<synchronous>, transform_indices = @transform_7, window_bounds = array<i64: 256, 128>}, {pipeline_mode = #tpu.pipeline_mode<synchronous>, transform_indices = @transform_8, window_bounds = array<i64: 1, 128>}, {transform_indices = @transform_9, window_bounds = array<i64: 2, 128>}]} {
    %c0 = arith.constant 0 : index
    %c0_0 = arith.constant 0 : index
    %0 = vector.load %arg1[%c0, %c0_0] : memref<2x256xf32, #tpu.memory_space<vmem>>, vector<2x256xf32>
    %c0_1 = arith.constant 0 : index
    %c0_2 = arith.constant 0 : index
    %1 = vector.load %arg2[%c0_1, %c0_2] : memref<256x512xf32, #tpu.memory_space<vmem>>, vector<256x512xf32>
    %cst = arith.constant dense<0.000000e+00> : vector<2x512xf32>
    %2 = tpu.matmul %0, %1, %cst {dimension_numbers = #tpu.dot_dimension_numbers<[1], [0], [0], [1], [0, 0, 1, 1], [], []>} : vector<2x256xf32>, vector<256x512xf32>, vector<2x512xf32> -> vector<2x512xf32>
    %c0_3 = arith.constant 0 : index
    %c0_4 = arith.constant 0 : index
    %3 = vector.load %arg3[%c0_3, %c0_4] : memref<1x512xf32, #tpu.memory_space<vmem>>, vector<1x512xf32>
    %4 = vector.broadcast %3 : vector<1x512xf32> to vector<2x512xf32>
    %5 = arith.addf %2, %4 : vector<2x512xf32>
    %cst_5 = arith.constant 0.000000e+00 : f32
    %6 = vector.broadcast %cst_5 : f32 to vector<2x512xf32>
    %7 = arith.cmpf oge, %5, %6 : vector<2x512xf32>
    %cst_6 = arith.constant 5.000000e-02 : f32
    %8 = vector.broadcast %cst_6 : f32 to vector<2x512xf32>
    %9 = arith.mulf %8, %5 : vector<2x512xf32>
    %10 = arith.select %7, %5, %9 : vector<2x512xi1>, vector<2x512xf32>
    %c0_7 = arith.constant 0 : index
    %c0_8 = arith.constant 0 : index
    %11 = vector.load %arg4[%c0_7, %c0_8] : memref<512x384xf32, #tpu.memory_space<vmem>>, vector<512x384xf32>
    %cst_9 = arith.constant dense<0.000000e+00> : vector<2x384xf32>
    %12 = tpu.matmul %10, %11, %cst_9 {dimension_numbers = #tpu.dot_dimension_numbers<[1], [0], [0], [1], [0, 0, 1, 1], [], []>} : vector<2x512xf32>, vector<512x384xf32>, vector<2x384xf32> -> vector<2x384xf32>
    %c0_10 = arith.constant 0 : index
    %c0_11 = arith.constant 0 : index
    %13 = vector.load %arg5[%c0_10, %c0_11] : memref<1x384xf32, #tpu.memory_space<vmem>>, vector<1x384xf32>
    %14 = vector.broadcast %13 : vector<1x384xf32> to vector<2x384xf32>
    %15 = arith.addf %12, %14 : vector<2x384xf32>
    %cst_12 = arith.constant 0.000000e+00 : f32
    %16 = vector.broadcast %cst_12 : f32 to vector<2x384xf32>
    %17 = arith.cmpf oge, %15, %16 : vector<2x384xf32>
    %cst_13 = arith.constant 5.000000e-02 : f32
    %18 = vector.broadcast %cst_13 : f32 to vector<2x384xf32>
    %19 = arith.mulf %18, %15 : vector<2x384xf32>
    %20 = arith.select %17, %15, %19 : vector<2x384xi1>, vector<2x384xf32>
    %c0_14 = arith.constant 0 : index
    %c0_15 = arith.constant 0 : index
    %21 = vector.load %arg6[%c0_14, %c0_15] : memref<384x256xf32, #tpu.memory_space<vmem>>, vector<384x256xf32>
    %cst_16 = arith.constant dense<0.000000e+00> : vector<2x256xf32>
    %22 = tpu.matmul %20, %21, %cst_16 {dimension_numbers = #tpu.dot_dimension_numbers<[1], [0], [0], [1], [0, 0, 1, 1], [], []>} : vector<2x384xf32>, vector<384x256xf32>, vector<2x256xf32> -> vector<2x256xf32>
    %c0_17 = arith.constant 0 : index
    %c0_18 = arith.constant 0 : index
    %23 = vector.load %arg7[%c0_17, %c0_18] : memref<1x256xf32, #tpu.memory_space<vmem>>, vector<1x256xf32>
    %24 = vector.broadcast %23 : vector<1x256xf32> to vector<2x256xf32>
    %25 = arith.addf %22, %24 : vector<2x256xf32>
    %cst_19 = arith.constant 0.000000e+00 : f32
    %26 = vector.broadcast %cst_19 : f32 to vector<2x256xf32>
    %27 = arith.cmpf oge, %25, %26 : vector<2x256xf32>
    %cst_20 = arith.constant 5.000000e-02 : f32
    %28 = vector.broadcast %cst_20 : f32 to vector<2x256xf32>
    %29 = arith.mulf %28, %25 : vector<2x256xf32>
    %30 = arith.select %27, %25, %29 : vector<2x256xi1>, vector<2x256xf32>
    %c0_21 = arith.constant 0 : index
    %c0_22 = arith.constant 0 : index
    %31 = vector.load %arg8[%c0_21, %c0_22] : memref<256x128xf32, #tpu.memory_space<vmem>>, vector<256x128xf32>
    %cst_23 = arith.constant dense<0.000000e+00> : vector<2x128xf32>
    %32 = tpu.matmul %30, %31, %cst_23 {dimension_numbers = #tpu.dot_dimension_numbers<[1], [0], [0], [1], [0, 0, 1, 1], [], []>} : vector<2x256xf32>, vector<256x128xf32>, vector<2x128xf32> -> vector<2x128xf32>
    %c0_24 = arith.constant 0 : index
    %c0_25 = arith.constant 0 : index
    %33 = vector.load %arg9[%c0_24, %c0_25] : memref<1x128xf32, #tpu.memory_space<vmem>>, vector<1x128xf32>
    %34 = vector.broadcast %33 : vector<1x128xf32> to vector<2x128xf32>
    %35 = arith.addf %32, %34 : vector<2x128xf32>
    %c0_26 = arith.constant 0 : index
    %c0_27 = arith.constant 0 : index
    %36 = vector.load %arg10[%c0_26, %c0_27] : memref<2x128xf32, #tpu.memory_space<vmem>>, vector<2x128xf32>
    tpu.vector_store %arg10[%c0_26, %c0_27], %35 {strides = array<i32>} : memref<2x128xf32, #tpu.memory_space<vmem>>, vector<2x128xf32>,
    return
  }
  func.func @transform_0(%arg0: i32) -> (i32, i32) {
    %c0_i32 = arith.constant 0 : i32
    %c0_i32_0 = arith.constant 0 : i32
    return %arg0, %c0_i32 : i32, i32
  }
  func.func @transform_1(%arg0: i32) -> (i32, i32) {
    %c0_i32 = arith.constant 0 : i32
    %c0_i32_0 = arith.constant 0 : i32
    %c0_i32_1 = arith.constant 0 : i32
    return %c0_i32, %c0_i32_0 : i32, i32
  }
  func.func @transform_2(%arg0: i32) -> (i32, i32) {
    %c0_i32 = arith.constant 0 : i32
    %c0_i32_0 = arith.constant 0 : i32
    %c0_i32_1 = arith.constant 0 : i32
    return %c0_i32, %c0_i32_0 : i32, i32
  }
  func.func @transform_3(%arg0: i32) -> (i32, i32) {
    %c0_i32 = arith.constant 0 : i32
    %c0_i32_0 = arith.constant 0 : i32
    %c0_i32_1 = arith.constant 0 : i32
    return %c0_i32, %c0_i32_0 : i32, i32
  }
  func.func @transform_4(%arg0: i32) -> (i32, i32) {
    %c0_i32 = arith.constant 0 : i32
    %c0_i32_0 = arith.constant 0 : i32
    %c0_i32_1 = arith.constant 0 : i32
    return %c0_i32, %c0_i32_0 : i32, i32
  }
  func.func @transform_5(%arg0: i32) -> (i32, i32) {
    %c0_i32 = arith.constant 0 : i32
    %c0_i32_0 = arith.constant 0 : i32
    %c0_i32_1 = arith.constant 0 : i32
    return %c0_i32, %c0_i32_0 : i32, i32
  }
  func.func @transform_6(%arg0: i32) -> (i32, i32) {
    %c0_i32 = arith.constant 0 : i32
    %c0_i32_0 = arith.constant 0 : i32
    %c0_i32_1 = arith.constant 0 : i32
    return %c0_i32, %c0_i32_0 : i32, i32
  }
  func.func @transform_7(%arg0: i32) -> (i32, i32) {
    %c0_i32 = arith.constant 0 : i32
    %c0_i32_0 = arith.constant 0 : i32
    %c0_i32_1 = arith.constant 0 : i32
    return %c0_i32, %c0_i32_0 : i32, i32
  }
  func.func @transform_8(%arg0: i32) -> (i32, i32) {
    %c0_i32 = arith.constant 0 : i32
    %c0_i32_0 = arith.constant 0 : i32
    %c0_i32_1 = arith.constant 0 : i32
    return %c0_i32, %c0_i32_0 : i32, i32
  }
  func.func @transform_9(%arg0: i32) -> (i32, i32) {
    %c0_i32 = arith.constant 0 : i32
    %c0_i32_0 = arith.constant 0 : i32
    return %arg0, %c0_i32 : i32, i32
  }
}

</mosaic_0001>

<llo_original>
// kernel: fully_connect_modul_300_forward.1
$region0: #{fully_connect_modul_300_forward.1}
  #allocation0 [shape = 'u32[]', space=smem, size = 0x4, offset = 0x4, fixed_abs, tag = 'smem constant byte address 0x4 - core index']
  #allocation1 [shape = 'u32[144,128]{1,0:T(1,128)}', space=vmem, size = 0x12000, scoped, tag = 'internal scratch']
  %s0 = inlined_call_operand.vmem [shape: f32[2,256], index: 0, kind: input, shape index: {}]
  %s1 = inlined_call_operand.vmem [shape: f32[256,512], index: 1, kind: input, shape index: {}]
  %s2 = inlined_call_operand.vmem [shape: f32[1,512], index: 2, kind: input, shape index: {}]
  %s3 = inlined_call_operand.vmem [shape: f32[512,384], index: 3, kind: input, shape index: {}]
  %s4 = inlined_call_operand.vmem [shape: f32[1,384], index: 4, kind: input, shape index: {}]
  %s5 = inlined_call_operand.vmem [shape: f32[384,256], index: 5, kind: input, shape index: {}]
  %s6 = inlined_call_operand.vmem [shape: f32[1,256], index: 6, kind: input, shape index: {}]
  %s7 = inlined_call_operand.vmem [shape: f32[256,128], index: 7, kind: input, shape index: {}]
  %s8 = inlined_call_operand.vmem [shape: f32[1,128], index: 8, kind: input, shape index: {}]
  %s9 = inlined_call_operand.vmem [shape: f32[2,128], index: 9, kind: output, shape index: {}]
  %s10 = sld [smem:[#allocation0]]
  $region46: #{fully_connect_modul_300_forward.1} parent=0
    _
  %s12 = ssub.s32 1, %s10
  %s13 = scalar_select 0, %s12, %s10
  // Predicated region
  $region2: #{fully_connect_modul_300_forward.1} parent=0 // pred_check
    _
  $region3: #{fully_connect_modul_300_forward.1} parent=0 // pred_check_branch
    %15 = sbr.rel (0) target = $region5
  $region4: #{fully_connect_modul_300_forward.1} parent=0 // pred_region
    _
  $region5: #{fully_connect_modul_300_forward.1} parent=0 // pred_fallthru
    _
  // Predicated region
  $region6: #{fully_connect_modul_300_forward.1} parent=0 // pred_check
    _
  $region7: #{fully_connect_modul_300_forward.1} parent=0 // pred_check_branch
    %17 = sbr.rel (0) target = $region9
  $region8: #{fully_connect_modul_300_forward.1} parent=0 // pred_region
    _
  $region9: #{fully_connect_modul_300_forward.1} parent=0 // pred_fallthru
    _
  // Predicated region
  $region10: #{fully_connect_modul_300_forward.1} parent=0 // pred_check
    _
  $region11: #{fully_connect_modul_300_forward.1} parent=0 // pred_check_branch
    %19 = sbr.rel (0) target = $region13
  $region12: #{fully_connect_modul_300_forward.1} parent=0 // pred_region
    _
  $region13: #{fully_connect_modul_300_forward.1} parent=0 // pred_fallthru
    _
  // Predicated region
  $region14: #{fully_connect_modul_300_forward.1} parent=0 // pred_check
    _
  $region15: #{fully_connect_modul_300_forward.1} parent=0 // pred_check_branch
    %21 = sbr.rel (0) target = $region17
  $region16: #{fully_connect_modul_300_forward.1} parent=0 // pred_region
    _
  $region17: #{fully_connect_modul_300_forward.1} parent=0 // pred_fallthru
    _
  // Predicated region
  $region18: #{fully_connect_modul_300_forward.1} parent=0 // pred_check
    _
  $region19: #{fully_connect_modul_300_forward.1} parent=0 // pred_check_branch
    %23 = sbr.rel (0) target = $region21
  $region20: #{fully_connect_modul_300_forward.1} parent=0 // pred_region
    _
  $region21: #{fully_connect_modul_300_forward.1} parent=0 // pred_fallthru
    _
  // Predicated region
  $region22: #{fully_connect_modul_300_forward.1} parent=0 // pred_check
    _
  $region23: #{fully_connect_modul_300_forward.1} parent=0 // pred_check_branch
    %25 = sbr.rel (0) target = $region25
  $region24: #{fully_connect_modul_300_forward.1} parent=0 // pred_region
    _
  $region25: #{fully_connect_modul_300_forward.1} parent=0 // pred_fallthru
    _
  // Predicated region
  $region26: #{fully_connect_modul_300_forward.1} parent=0 // pred_check
    _
  $region27: #{fully_connect_modul_300_forward.1} parent=0 // pred_check_branch
    %27 = sbr.rel (0) target = $region29
  $region28: #{fully_connect_modul_300_forward.1} parent=0 // pred_region
    _
  $region29: #{fully_connect_modul_300_forward.1} parent=0 // pred_fallthru
    _
  // Predicated region
  $region30: #{fully_connect_modul_300_forward.1} parent=0 // pred_check
    _
  $region31: #{fully_connect_modul_300_forward.1} parent=0 // pred_check_branch
    %29 = sbr.rel (0) target = $region33
  $region32: #{fully_connect_modul_300_forward.1} parent=0 // pred_region
    _
  $region33: #{fully_connect_modul_300_forward.1} parent=0 // pred_fallthru
    _
  // Predicated region
  $region34: #{fully_connect_modul_300_forward.1} parent=0 // pred_check
    _
  $region35: #{fully_connect_modul_300_forward.1} parent=0 // pred_check_branch
    %31 = sbr.rel (0) target = $region37
  $region36: #{fully_connect_modul_300_forward.1} parent=0 // pred_region
    _
  $region37: #{fully_connect_modul_300_forward.1} parent=0 // pred_fallthru
    _
  %v32 = vld [vmem:[%s0] sm:$0xf]
  %v33 = vld [vmem:[%s1] sm:$0xff]
  %v34 = vld [vmem:[%s1 + $0x8] sm:$0xff]
  %v35 = vld [vmem:[%s1 + $0x10] sm:$0xff]
  %v36 = vld [vmem:[%s1 + $0x18] sm:$0xff]
  %v37 = vld [vmem:[%s1 + $0x20] sm:$0xff]
  %v38 = vld [vmem:[%s1 + $0x28] sm:$0xff]
  %v39 = vld [vmem:[%s1 + $0x30] sm:$0xff]
  %v40 = vld [vmem:[%s1 + $0x38] sm:$0xff]
  %v41 = vld [vmem:[%s1 + $0x40] sm:$0xff]
  %v42 = vld [vmem:[%s1 + $0x48] sm:$0xff]
  %v43 = vld [vmem:[%s1 + $0x50] sm:$0xff]
  %v44 = vld [vmem:[%s1 + $0x58] sm:$0xff]
  %v45 = vld [vmem:[%s1 + $0x60] sm:$0xff]
  %v46 = vld [vmem:[%s1 + $0x68] sm:$0xff]
  %v47 = vld [vmem:[%s1 + $0x70] sm:$0xff]
  %v48 = vld [vmem:[%s1 + $0x78] sm:$0xff]
  %v49 = vld [vmem:[%s1 + $0x80] sm:$0xff]
  %v50 = vld [vmem:[%s1 + $0x88] sm:$0xff]
  %v51 = vld [vmem:[%s1 + $0x90] sm:$0xff]
  %v52 = vld [vmem:[%s1 + $0x98] sm:$0xff]
  %v53 = vld [vmem:[%s1 + $0xa0] sm:$0xff]
  %v54 = vld [vmem:[%s1 + $0xa8] sm:$0xff]
  %v55 = vld [vmem:[%s1 + $0xb0] sm:$0xff]
  %v56 = vld [vmem:[%s1 + $0xb8] sm:$0xff]
  %v57 = vld [vmem:[%s1 + $0xc0] sm:$0xff]
  %v58 = vld [vmem:[%s1 + $0xc8] sm:$0xff]
  %v59 = vld [vmem:[%s1 + $0xd0] sm:$0xff]
  %v60 = vld [vmem:[%s1 + $0xd8] sm:$0xff]
  %v61 = vld [vmem:[%s1 + $0xe0] sm:$0xff]
  %v62 = vld [vmem:[%s1 + $0xe8] sm:$0xff]
  %v63 = vld [vmem:[%s1 + $0xf0] sm:$0xff]
  %v64 = vld [vmem:[%s1 + $0xf8] sm:$0xff]
  %v65 = vld [vmem:[%s1 + $0x100] sm:$0xff]
  %v66 = vld [vmem:[%s1 + $0x108] sm:$0xff]
  %v67 = vld [vmem:[%s1 + $0x110] sm:$0xff]
  %v68 = vld [vmem:[%s1 + $0x118] sm:$0xff]
  %v69 = vld [vmem:[%s1 + $0x120] sm:$0xff]
  %v70 = vld [vmem:[%s1 + $0x128] sm:$0xff]
  %v71 = vld [vmem:[%s1 + $0x130] sm:$0xff]
  %v72 = vld [vmem:[%s1 + $0x138] sm:$0xff]
  %v73 = vld [vmem:[%s1 + $0x140] sm:$0xff]
  %v74 = vld [vmem:[%s1 + $0x148] sm:$0xff]
  %v75 = vld [vmem:[%s1 + $0x150] sm:$0xff]
  %v76 = vld [vmem:[%s1 + $0x158] sm:$0xff]
  %v77 = vld [vmem:[%s1 + $0x160] sm:$0xff]
  %v78 = vld [vmem:[%s1 + $0x168] sm:$0xff]
  %v79 = vld [vmem:[%s1 + $0x170] sm:$0xff]
  %v80 = vld [vmem:[%s1 + $0x178] sm:$0xff]
  %v81 = vld [vmem:[%s1 + $0x180] sm:$0xff]
  %v82 = vld [vmem:[%s1 + $0x188] sm:$0xff]
  %v83 = vld [vmem:[%s1 + $0x190] sm:$0xff]
  %v84 = vld [vmem:[%s1 + $0x198] sm:$0xff]
  %v85 = vld [vmem:[%s1 + $0x1a0] sm:$0xff]
  %v86 = vld [vmem:[%s1 + $0x1a8] sm:$0xff]
  %v87 = vld [vmem:[%s1 + $0x1b0] sm:$0xff]
  %v88 = vld [vmem:[%s1 + $0x1b8] sm:$0xff]
  %v89 = vld [vmem:[%s1 + $0x1c0] sm:$0xff]
  %v90 = vld [vmem:[%s1 + $0x1c8] sm:$0xff]
  %v91 = vld [vmem:[%s1 + $0x1d0] sm:$0xff]
  %v92 = vld [vmem:[%s1 + $0x1d8] sm:$0xff]
  %v93 = vld [vmem:[%s1 + $0x1e0] sm:$0xff]
  %v94 = vld [vmem:[%s1 + $0x1e8] sm:$0xff]
  %v95 = vld [vmem:[%s1 + $0x1f0] sm:$0xff]
  %v96 = vld [vmem:[%s1 + $0x1f8] sm:$0xff]
  %v97 = vld [vmem:[%s1 + $0x200] sm:$0xff]
  %v98 = vld [vmem:[%s1 + $0x208] sm:$0xff]
  %v99 = vld [vmem:[%s1 + $0x210] sm:$0xff]
  %v100 = vld [vmem:[%s1 + $0x218] sm:$0xff]
  %v101 = vld [vmem:[%s1 + $0x220] sm:$0xff]
  %v102 = vld [vmem:[%s1 + $0x228] sm:$0xff]
  %v103 = vld [vmem:[%s1 + $0x230] sm:$0xff]
  %v104 = vld [vmem:[%s1 + $0x238] sm:$0xff]
  %v105 = vld [vmem:[%s1 + $0x240] sm:$0xff]
  %v106 = vld [vmem:[%s1 + $0x248] sm:$0xff]
  %v107 = vld [vmem:[%s1 + $0x250] sm:$0xff]
  %v108 = vld [vmem:[%s1 + $0x258] sm:$0xff]
  %v109 = vld [vmem:[%s1 + $0x260] sm:$0xff]
  %v110 = vld [vmem:[%s1 + $0x268] sm:$0xff]
  %v111 = vld [vmem:[%s1 + $0x270] sm:$0xff]
  %v112 = vld [vmem:[%s1 + $0x278] sm:$0xff]
  %v113 = vld [vmem:[%s1 + $0x280] sm:$0xff]
  %v114 = vld [vmem:[%s1 + $0x288] sm:$0xff]
  %v115 = vld [vmem:[%s1 + $0x290] sm:$0xff]
  %v116 = vld [vmem:[%s1 + $0x298] sm:$0xff]
  %v117 = vld [vmem:[%s1 + $0x2a0] sm:$0xff]
  %v118 = vld [vmem:[%s1 + $0x2a8] sm:$0xff]
  %v119 = vld [vmem:[%s1 + $0x2b0] sm:$0xff]
  %v120 = vld [vmem:[%s1 + $0x2b8] sm:$0xff]
  %v121 = vld [vmem:[%s1 + $0x2c0] sm:$0xff]
  %v122 = vld [vmem:[%s1 + $0x2c8] sm:$0xff]
  %v123 = vld [vmem:[%s1 + $0x2d0] sm:$0xff]
  %v124 = vld [vmem:[%s1 + $0x2d8] sm:$0xff]
  %v125 = vld [vmem:[%s1 + $0x2e0] sm:$0xff]
  %v126 = vld [vmem:[%s1 + $0x2e8] sm:$0xff]
  %v127 = vld [vmem:[%s1 + $0x2f0] sm:$0xff]
  %v128 = vld [vmem:[%s1 + $0x2f8] sm:$0xff]
  %v129 = vld [vmem:[%s1 + $0x300] sm:$0xff]
  %v130 = vld [vmem:[%s1 + $0x308] sm:$0xff]
  %v131 = vld [vmem:[%s1 + $0x310] sm:$0xff]
  %v132 = vld [vmem:[%s1 + $0x318] sm:$0xff]
  %v133 = vld [vmem:[%s1 + $0x320] sm:$0xff]
  %v134 = vld [vmem:[%s1 + $0x328] sm:$0xff]
  %v135 = vld [vmem:[%s1 + $0x330] sm:$0xff]
  %v136 = vld [vmem:[%s1 + $0x338] sm:$0xff]
  %v137 = vld [vmem:[%s1 + $0x340] sm:$0xff]
  %v138 = vld [vmem:[%s1 + $0x348] sm:$0xff]
  %v139 = vld [vmem:[%s1 + $0x350] sm:$0xff]
  %v140 = vld [vmem:[%s1 + $0x358] sm:$0xff]
  %v141 = vld [vmem:[%s1 + $0x360] sm:$0xff]
  %v142 = vld [vmem:[%s1 + $0x368] sm:$0xff]
  %v143 = vld [vmem:[%s1 + $0x370] sm:$0xff]
  %v144 = vld [vmem:[%s1 + $0x378] sm:$0xff]
  %v145 = vld [vmem:[%s1 + $0x380] sm:$0xff]
  %v146 = vld [vmem:[%s1 + $0x388] sm:$0xff]
  %v147 = vld [vmem:[%s1 + $0x390] sm:$0xff]
  %v148 = vld [vmem:[%s1 + $0x398] sm:$0xff]
  %v149 = vld [vmem:[%s1 + $0x3a0] sm:$0xff]
  %v150 = vld [vmem:[%s1 + $0x3a8] sm:$0xff]
  %v151 = vld [vmem:[%s1 + $0x3b0] sm:$0xff]
  %v152 = vld [vmem:[%s1 + $0x3b8] sm:$0xff]
  %v153 = vld [vmem:[%s1 + $0x3c0] sm:$0xff]
  %v154 = vld [vmem:[%s1 + $0x3c8] sm:$0xff]
  %v155 = vld [vmem:[%s1 + $0x3d0] sm:$0xff]
  %v156 = vld [vmem:[%s1 + $0x3d8] sm:$0xff]
  %v157 = vld [vmem:[%s1 + $0x3e0] sm:$0xff]
  %v158 = vld [vmem:[%s1 + $0x3e8] sm:$0xff]
  %v159 = vld [vmem:[%s1 + $0x3f0] sm:$0xff]
  %v160 = vld [vmem:[%s1 + $0x3f8] sm:$0xff]
  %v161 = vld [vmem:[%s2] sm:$0xf]
  %v163 = vlaneseq
  %v164 = vshrl.u32 %v163, 7
  %v165 = vsub.s32 0, %v164
  %v166 = vrot.slane %v161, %v165
  %v167 = vlaneseq
  %v168 = vshrl.u32 %v167, 7
  %v169 = vsub.s32 1, %v168
  %v170 = vrot.slane %v161, %v169
  %v171 = vlaneseq
  %v172 = vshrl.u32 %v171, 7
  %v173 = vsub.s32 2, %v172
  %v174 = vrot.slane %v161, %v173
  %v175 = vlaneseq
  %v176 = vshrl.u32 %v175, 7
  %v177 = vsub.s32 3, %v176
  %v178 = vrot.slane %v161, %v177
  %v185 = vunpack.c.l.s4 1983009808
  %v186 = vunpack.c.0.s8 %v185
  %v187 = vlaneseq
  %v188 = vshrl.u32 %v187, 7
  %v189 = vsub.s32 %v186, %v188
  %v190 = vrot.slane %v32, %v189
  %v191 = vcombine.high %v190, %v190
  %194 = vmatprep.subr.mxu0 %v34
  %195 = vmatpush1.msra.mxu0 %v33
  %196 = vmatprep.subr.mxu0 %v38
  %197 = vmatpush1.msra.mxu0 %v37
  %198 = vmatprep.subr.mxu0 %v42
  %199 = vmatpush1.msra.mxu0 %v41
  %200 = vmatprep.subr.mxu0 %v46
  %201 = vmatpush1.msra.mxu0 %v45
  %202 = vmatprep.subr.mxu0 %v50
  %203 = vmatpush1.msra.mxu0 %v49
  %204 = vmatprep.subr.mxu0 %v54
  %205 = vmatpush1.msra.mxu0 %v53
  %206 = vmatprep.subr.mxu0 %v58
  %207 = vmatpush1.msra.mxu0 %v57
  %208 = vmatprep.subr.mxu0 %v62
  %209 = vmatpush1.msra.mxu0 %v61
  %210 = vmatprep.subr.mxu0 %v66
  %211 = vmatpush1.msra.mxu0 %v65
  %212 = vmatprep.subr.mxu0 %v70
  %213 = vmatpush1.msra.mxu0 %v69
  %214 = vmatprep.subr.mxu0 %v74
  %215 = vmatpush1.msra.mxu0 %v73
  %216 = vmatprep.subr.mxu0 %v78
  %217 = vmatpush1.msra.mxu0 %v77
  %218 = vmatprep.subr.mxu0 %v82
  %219 = vmatpush1.msra.mxu0 %v81
  %220 = vmatprep.subr.mxu0 %v86
  %221 = vmatpush1.msra.mxu0 %v85
  %222 = vmatprep.subr.mxu0 %v90
  %223 = vmatpush1.msra.mxu0 %v89
  %224 = vmatprep.subr.mxu0 %v94
  %225 = vmatpush1.msra.mxu0 %v93
  %226 = vmatprep.subr.mxu0 %v98
  %227 = vmatpush1.msra.mxu0 %v97
  %228 = vmatprep.subr.mxu0 %v102
  %229 = vmatpush1.msra.mxu0 %v101
  %230 = vmatprep.subr.mxu0 %v106
  %231 = vmatpush1.msra.mxu0 %v105
  %232 = vmatprep.subr.mxu0 %v110
  %233 = vmatpush1.msra.mxu0 %v109
  %234 = vmatprep.subr.mxu0 %v114
  %235 = vmatpush1.msra.mxu0 %v113
  %236 = vmatprep.subr.mxu0 %v118
  %237 = vmatpush1.msra.mxu0 %v117
  %238 = vmatprep.subr.mxu0 %v122
  %239 = vmatpush1.msra.mxu0 %v121
  %240 = vmatprep.subr.mxu0 %v126
  %241 = vmatpush1.msra.mxu0 %v125
  %242 = vmatprep.subr.mxu0 %v130
  %243 = vmatpush1.msra.mxu0 %v129
  %244 = vmatprep.subr.mxu0 %v134
  %245 = vmatpush1.msra.mxu0 %v133
  %246 = vmatprep.subr.mxu0 %v138
  %247 = vmatpush1.msra.mxu0 %v137
  %248 = vmatprep.subr.mxu0 %v142
  %249 = vmatpush1.msra.mxu0 %v141
  %250 = vmatprep.subr.mxu0 %v146
  %251 = vmatpush1.msra.mxu0 %v145
  %252 = vmatprep.subr.mxu0 %v150
  %253 = vmatpush1.msra.mxu0 %v149
  %254 = vmatprep.subr.mxu0 %v154
  %255 = vmatpush1.msra.mxu0 %v153
  %256 = vmatprep.subr.mxu0 %v158
  %257 = vmatpush1.msra.mxu0 %v157
  %258 = vmatprep.mubr.f32.mxu0 %v191
  %259 = vmatmul.mubr.f32.gmra.mrb[0].mxu0 %v190
  %v260 = vpop.f32.mrb[0].mxu0
  %v261 = vadd.f32 %v166, %v260
  %v262 = vpop.f32.mrb[0].mxu0
  %v263 = vadd.f32 %v170, %v262
  %264 = vdwg.mxu0
  %265 = vmatprep.subr.mxu0 %v36
  %266 = vmatpush1.msra.mxu0 %v35
  %267 = vmatprep.subr.mxu0 %v40
  %268 = vmatpush1.msra.mxu0 %v39
  %269 = vmatprep.subr.mxu0 %v44
  %270 = vmatpush1.msra.mxu0 %v43
  %271 = vmatprep.subr.mxu0 %v48
  %272 = vmatpush1.msra.mxu0 %v47
  %273 = vmatprep.subr.mxu0 %v52
  %274 = vmatpush1.msra.mxu0 %v51
  %275 = vmatprep.subr.mxu0 %v56
  %276 = vmatpush1.msra.mxu0 %v55
  %277 = vmatprep.subr.mxu0 %v60
  %278 = vmatpush1.msra.mxu0 %v59
  %279 = vmatprep.subr.mxu0 %v64
  %280 = vmatpush1.msra.mxu0 %v63
  %281 = vmatprep.subr.mxu0 %v68
  %282 = vmatpush1.msra.mxu0 %v67
  %283 = vmatprep.subr.mxu0 %v72
  %284 = vmatpush1.msra.mxu0 %v71
  %285 = vmatprep.subr.mxu0 %v76
  %286 = vmatpush1.msra.mxu0 %v75
  %287 = vmatprep.subr.mxu0 %v80
  %288 = vmatpush1.msra.mxu0 %v79
  %289 = vmatprep.subr.mxu0 %v84
  %290 = vmatpush1.msra.mxu0 %v83
  %291 = vmatprep.subr.mxu0 %v88
  %292 = vmatpush1.msra.mxu0 %v87
  %293 = vmatprep.subr.mxu0 %v92
  %294 = vmatpush1.msra.mxu0 %v91
  %295 = vmatprep.subr.mxu0 %v96
  %296 = vmatpush1.msra.mxu0 %v95
  %297 = vmatprep.subr.mxu0 %v100
  %298 = vmatpush1.msra.mxu0 %v99
  %299 = vmatprep.subr.mxu0 %v104
  %300 = vmatpush1.msra.mxu0 %v103
  %301 = vmatprep.subr.mxu0 %v108
  %302 = vmatpush1.msra.mxu0 %v107
  %303 = vmatprep.subr.mxu0 %v112
  %304 = vmatpush1.msra.mxu0 %v111
  %305 = vmatprep.subr.mxu0 %v116
  %306 = vmatpush1.msra.mxu0 %v115
  %307 = vmatprep.subr.mxu0 %v120
  %308 = vmatpush1.msra.mxu0 %v119
  %309 = vmatprep.subr.mxu0 %v124
  %310 = vmatpush1.msra.mxu0 %v123
  %311 = vmatprep.subr.mxu0 %v128
  %312 = vmatpush1.msra.mxu0 %v127
  %313 = vmatprep.subr.mxu0 %v132
  %314 = vmatpush1.msra.mxu0 %v131
  %315 = vmatprep.subr.mxu0 %v136
  %316 = vmatpush1.msra.mxu0 %v135
  %317 = vmatprep.subr.mxu0 %v140
  %318 = vmatpush1.msra.mxu0 %v139
  %319 = vmatprep.subr.mxu0 %v144
  %320 = vmatpush1.msra.mxu0 %v143
  %321 = vmatprep.subr.mxu0 %v148
  %322 = vmatpush1.msra.mxu0 %v147
  %323 = vmatprep.subr.mxu0 %v152
  %324 = vmatpush1.msra.mxu0 %v151
  %325 = vmatprep.subr.mxu0 %v156
  %326 = vmatpush1.msra.mxu0 %v155
  %327 = vmatprep.subr.mxu0 %v160
  %328 = vmatpush1.msra.mxu0 %v159
  %329 = vmatprep.mubr.f32.mxu0 %v191
  %330 = vmatmul.mubr.f32.gmra.mrb[0].mxu0 %v190
  %v331 = vpop.f32.mrb[0].mxu0
  %v332 = vadd.f32 %v174, %v331
  %v333 = vpop.f32.mrb[0].mxu0
  %v334 = vadd.f32 %v178, %v333
  %335 = vdwg.mxu0
  %vm336 = vcmp.ge.f32.partialorder %v261, 0.0
  %vm337 = vcmp.ge.f32.partialorder %v263, 0.0
  %vm338 = vcmp.ge.f32.partialorder %v332, 0.0
  %vm339 = vcmp.ge.f32.partialorder %v334, 0.0
  %v340 = vmul.f32 %v261, 0.05
  %v341 = vmul.f32 %v263, 0.05
  %v342 = vmul.f32 %v332, 0.05
  %v343 = vmul.f32 %v334, 0.05
  %v344 = vsel %vm336, %v261, %v340
  %v345 = vsel %vm337, %v263, %v341
  %v346 = vsel %vm338, %v332, %v342
  %v347 = vsel %vm339, %v334, %v343
  %v348 = vld [vmem:[%s3] sm:$0xff]
  %v349 = vld [vmem:[%s3 + $0x8] sm:$0xff]
  %v350 = vld [vmem:[%s3 + $0x10] sm:$0xff]
  %v351 = vld [vmem:[%s3 + $0x18] sm:$0xff]
  %v352 = vld [vmem:[%s3 + $0x20] sm:$0xff]
  %v353 = vld [vmem:[%s3 + $0x28] sm:$0xff]
  %v354 = vld [vmem:[%s3 + $0x30] sm:$0xff]
  %v355 = vld [vmem:[%s3 + $0x38] sm:$0xff]
  %v356 = vld [vmem:[%s3 + $0x40] sm:$0xff]
  %v357 = vld [vmem:[%s3 + $0x48] sm:$0xff]
  %v358 = vld [vmem:[%s3 + $0x50] sm:$0xff]
  %v359 = vld [vmem:[%s3 + $0x58] sm:$0xff]
  %v360 = vld [vmem:[%s3 + $0x60] sm:$0xff]
  %v361 = vld [vmem:[%s3 + $0x68] sm:$0xff]
  %v362 = vld [vmem:[%s3 + $0x70] sm:$0xff]
  %v363 = vld [vmem:[%s3 + $0x78] sm:$0xff]
  %v364 = vld [vmem:[%s3 + $0x80] sm:$0xff]
  %v365 = vld [vmem:[%s3 + $0x88] sm:$0xff]
  %v366 = vld [vmem:[%s3 + $0x90] sm:$0xff]
  %v367 = vld [vmem:[%s3 + $0x98] sm:$0xff]
  %v368 = vld [vmem:[%s3 + $0xa0] sm:$0xff]
  %v369 = vld [vmem:[%s3 + $0xa8] sm:$0xff]
  %v370 = vld [vmem:[%s3 + $0xb0] sm:$0xff]
  %v371 = vld [vmem:[%s3 + $0xb8] sm:$0xff]
  %v372 = vld [vmem:[%s3 + $0xc0] sm:$0xff]
  %v373 = vld [vmem:[%s3 + $0xc8] sm:$0xff]
  %v374 = vld [vmem:[%s3 + $0xd0] sm:$0xff]
  %v375 = vld [vmem:[%s3 + $0xd8] sm:$0xff]
  %v376 = vld [vmem:[%s3 + $0xe0] sm:$0xff]
  %v377 = vld [vmem:[%s3 + $0xe8] sm:$0xff]
  %v378 = vld [vmem:[%s3 + $0xf0] sm:$0xff]
  %v379 = vld [vmem:[%s3 + $0xf8] sm:$0xff]
  %v380 = vld [vmem:[%s3 + $0x100] sm:$0xff]
  %v381 = vld [vmem:[%s3 + $0x108] sm:$0xff]
  %v382 = vld [vmem:[%s3 + $0x110] sm:$0xff]
  %v383 = vld [vmem:[%s3 + $0x118] sm:$0xff]
  %v384 = vld [vmem:[%s3 + $0x120] sm:$0xff]
  %v385 = vld [vmem:[%s3 + $0x128] sm:$0xff]
  %v386 = vld [vmem:[%s3 + $0x130] sm:$0xff]
  %v387 = vld [vmem:[%s3 + $0x138] sm:$0xff]
  %v388 = vld [vmem:[%s3 + $0x140] sm:$0xff]
  %v389 = vld [vmem:[%s3 + $0x148] sm:$0xff]
  %v390 = vld [vmem:[%s3 + $0x150] sm:$0xff]
  %v391 = vld [vmem:[%s3 + $0x158] sm:$0xff]
  %v392 = vld [vmem:[%s3 + $0x160] sm:$0xff]
  %v393 = vld [vmem:[%s3 + $0x168] sm:$0xff]
  %v394 = vld [vmem:[%s3 + $0x170] sm:$0xff]
  %v395 = vld [vmem:[%s3 + $0x178] sm:$0xff]
  %v396 = vld [vmem:[%s3 + $0x180] sm:$0xff]
  %v397 = vld [vmem:[%s3 + $0x188] sm:$0xff]
  %v398 = vld [vmem:[%s3 + $0x190] sm:$0xff]
  %v399 = vld [vmem:[%s3 + $0x198] sm:$0xff]
  %v400 = vld [vmem:[%s3 + $0x1a0] sm:$0xff]
  %v401 = vld [vmem:[%s3 + $0x1a8] sm:$0xff]
  %v402 = vld [vmem:[%s3 + $0x1b0] sm:$0xff]
  %v403 = vld [vmem:[%s3 + $0x1b8] sm:$0xff]
  %v404 = vld [vmem:[%s3 + $0x1c0] sm:$0xff]
  %v405 = vld [vmem:[%s3 + $0x1c8] sm:$0xff]
  %v406 = vld [vmem:[%s3 + $0x1d0] sm:$0xff]
  %v407 = vld [vmem:[%s3 + $0x1d8] sm:$0xff]
  %v408 = vld [vmem:[%s3 + $0x1e0] sm:$0xff]
  %v409 = vld [vmem:[%s3 + $0x1e8] sm:$0xff]
  %v410 = vld [vmem:[%s3 + $0x1f0] sm:$0xff]
  %v411 = vld [vmem:[%s3 + $0x1f8] sm:$0xff]
  %v412 = vld [vmem:[%s3 + $0x200] sm:$0xff]
  %v413 = vld [vmem:[%s3 + $0x208] sm:$0xff]
  %v414 = vld [vmem:[%s3 + $0x210] sm:$0xff]
  %v415 = vld [vmem:[%s3 + $0x218] sm:$0xff]
  %v416 = vld [vmem:[%s3 + $0x220] sm:$0xff]
  %v417 = vld [vmem:[%s3 + $0x228] sm:$0xff]
  %v418 = vld [vmem:[%s3 + $0x230] sm:$0xff]
  %v419 = vld [vmem:[%s3 + $0x238] sm:$0xff]
  %v420 = vld [vmem:[%s3 + $0x240] sm:$0xff]
  %v421 = vld [vmem:[%s3 + $0x248] sm:$0xff]
  %v422 = vld [vmem:[%s3 + $0x250] sm:$0xff]
  %v423 = vld [vmem:[%s3 + $0x258] sm:$0xff]
  %v424 = vld [vmem:[%s3 + $0x260] sm:$0xff]
  %v425 = vld [vmem:[%s3 + $0x268] sm:$0xff]
  %v426 = vld [vmem:[%s3 + $0x270] sm:$0xff]
  %v427 = vld [vmem:[%s3 + $0x278] sm:$0xff]
  %v428 = vld [vmem:[%s3 + $0x280] sm:$0xff]
  %v429 = vld [vmem:[%s3 + $0x288] sm:$0xff]
  %v430 = vld [vmem:[%s3 + $0x290] sm:$0xff]
  %v431 = vld [vmem:[%s3 + $0x298] sm:$0xff]
  %v432 = vld [vmem:[%s3 + $0x2a0] sm:$0xff]
  %v433 = vld [vmem:[%s3 + $0x2a8] sm:$0xff]
  %v434 = vld [vmem:[%s3 + $0x2b0] sm:$0xff]
  %v435 = vld [vmem:[%s3 + $0x2b8] sm:$0xff]
  %v436 = vld [vmem:[%s3 + $0x2c0] sm:$0xff]
  %v437 = vld [vmem:[%s3 + $0x2c8] sm:$0xff]
  %v438 = vld [vmem:[%s3 + $0x2d0] sm:$0xff]
  %v439 = vld [vmem:[%s3 + $0x2d8] sm:$0xff]
  %v440 = vld [vmem:[%s3 + $0x2e0] sm:$0xff]
  %v441 = vld [vmem:[%s3 + $0x2e8] sm:$0xff]
  %v442 = vld [vmem:[%s3 + $0x2f0] sm:$0xff]
  %v443 = vld [vmem:[%s3 + $0x2f8] sm:$0xff]
  %v444 = vld [vmem:[%s3 + $0x300] sm:$0xff]
  %v445 = vld [vmem:[%s3 + $0x308] sm:$0xff]
  %v446 = vld [vmem:[%s3 + $0x310] sm:$0xff]
  %v447 = vld [vmem:[%s3 + $0x318] sm:$0xff]
  %v448 = vld [vmem:[%s3 + $0x320] sm:$0xff]
  %v449 = vld [vmem:[%s3 + $0x328] sm:$0xff]
  %v450 = vld [vmem:[%s3 + $0x330] sm:$0xff]
  %v451 = vld [vmem:[%s3 + $0x338] sm:$0xff]
  %v452 = vld [vmem:[%s3 + $0x340] sm:$0xff]
  %v453 = vld [vmem:[%s3 + $0x348] sm:$0xff]
  %v454 = vld [vmem:[%s3 + $0x350] sm:$0xff]
  %v455 = vld [vmem:[%s3 + $0x358] sm:$0xff]
  %v456 = vld [vmem:[%s3 + $0x360] sm:$0xff]
  %v457 = vld [vmem:[%s3 + $0x368] sm:$0xff]
  %v458 = vld [vmem:[%s3 + $0x370] sm:$0xff]
  %v459 = vld [vmem:[%s3 + $0x378] sm:$0xff]
  %v460 = vld [vmem:[%s3 + $0x380] sm:$0xff]
  %v461 = vld [vmem:[%s3 + $0x388] sm:$0xff]
  %v462 = vld [vmem:[%s3 + $0x390] sm:$0xff]
  %v463 = vld [vmem:[%s3 + $0x398] sm:$0xff]
  %v464 = vld [vmem:[%s3 + $0x3a0] sm:$0xff]
  %v465 = vld [vmem:[%s3 + $0x3a8] sm:$0xff]
  %v466 = vld [vmem:[%s3 + $0x3b0] sm:$0xff]
  %v467 = vld [vmem:[%s3 + $0x3b8] sm:$0xff]
  %v468 = vld [vmem:[%s3 + $0x3c0] sm:$0xff]
  %v469 = vld [vmem:[%s3 + $0x3c8] sm:$0xff]
  %v470 = vld [vmem:[%s3 + $0x3d0] sm:$0xff]
  %v471 = vld [vmem:[%s3 + $0x3d8] sm:$0xff]
  %v472 = vld [vmem:[%s3 + $0x3e0] sm:$0xff]
  %v473 = vld [vmem:[%s3 + $0x3e8] sm:$0xff]
  %v474 = vld [vmem:[%s3 + $0x3f0] sm:$0xff]
  %v475 = vld [vmem:[%s3 + $0x3f8] sm:$0xff]
  %v476 = vld [vmem:[%s3 + $0x400] sm:$0xff]
  %v477 = vld [vmem:[%s3 + $0x408] sm:$0xff]
  %v478 = vld [vmem:[%s3 + $0x410] sm:$0xff]
  %v479 = vld [vmem:[%s3 + $0x418] sm:$0xff]
  %v480 = vld [vmem:[%s3 + $0x420] sm:$0xff]
  %v481 = vld [vmem:[%s3 + $0x428] sm:$0xff]
  %v482 = vld [vmem:[%s3 + $0x430] sm:$0xff]
  %v483 = vld [vmem:[%s3 + $0x438] sm:$0xff]
  %v484 = vld [vmem:[%s3 + $0x440] sm:$0xff]
  %v485 = vld [vmem:[%s3 + $0x448] sm:$0xff]
  %v486 = vld [vmem:[%s3 + $0x450] sm:$0xff]
  %v487 = vld [vmem:[%s3 + $0x458] sm:$0xff]
  %v488 = vld [vmem:[%s3 + $0x460] sm:$0xff]
  %v489 = vld [vmem:[%s3 + $0x468] sm:$0xff]
  %v490 = vld [vmem:[%s3 + $0x470] sm:$0xff]
  %v491 = vld [vmem:[%s3 + $0x478] sm:$0xff]
  %v492 = vld [vmem:[%s3 + $0x480] sm:$0xff]
  %v493 = vld [vmem:[%s3 + $0x488] sm:$0xff]
  %v494 = vld [vmem:[%s3 + $0x490] sm:$0xff]
  %v495 = vld [vmem:[%s3 + $0x498] sm:$0xff]
  %v496 = vld [vmem:[%s3 + $0x4a0] sm:$0xff]
  %v497 = vld [vmem:[%s3 + $0x4a8] sm:$0xff]
  %v498 = vld [vmem:[%s3 + $0x4b0] sm:$0xff]
  %v499 = vld [vmem:[%s3 + $0x4b8] sm:$0xff]
  %v500 = vld [vmem:[%s3 + $0x4c0] sm:$0xff]
  %v501 = vld [vmem:[%s3 + $0x4c8] sm:$0xff]
  %v502 = vld [vmem:[%s3 + $0x4d0] sm:$0xff]
  %v503 = vld [vmem:[%s3 + $0x4d8] sm:$0xff]
  %v504 = vld [vmem:[%s3 + $0x4e0] sm:$0xff]
  %v505 = vld [vmem:[%s3 + $0x4e8] sm:$0xff]
  %v506 = vld [vmem:[%s3 + $0x4f0] sm:$0xff]
  %v507 = vld [vmem:[%s3 + $0x4f8] sm:$0xff]
  %v508 = vld [vmem:[%s3 + $0x500] sm:$0xff]
  %v509 = vld [vmem:[%s3 + $0x508] sm:$0xff]
  %v510 = vld [vmem:[%s3 + $0x510] sm:$0xff]
  %v511 = vld [vmem:[%s3 + $0x518] sm:$0xff]
  %v512 = vld [vmem:[%s3 + $0x520] sm:$0xff]
  %v513 = vld [vmem:[%s3 + $0x528] sm:$0xff]
  %v514 = vld [vmem:[%s3 + $0x530] sm:$0xff]
  %v515 = vld [vmem:[%s3 + $0x538] sm:$0xff]
  %v516 = vld [vmem:[%s3 + $0x540] sm:$0xff]
  %v517 = vld [vmem:[%s3 + $0x548] sm:$0xff]
  %v518 = vld [vmem:[%s3 + $0x550] sm:$0xff]
  %v519 = vld [vmem:[%s3 + $0x558] sm:$0xff]
  %v520 = vld [vmem:[%s3 + $0x560] sm:$0xff]
  %v521 = vld [vmem:[%s3 + $0x568] sm:$0xff]
  %v522 = vld [vmem:[%s3 + $0x570] sm:$0xff]
  %v523 = vld [vmem:[%s3 + $0x578] sm:$0xff]
  %v524 = vld [vmem:[%s3 + $0x580] sm:$0xff]
  %v525 = vld [vmem:[%s3 + $0x588] sm:$0xff]
  %v526 = vld [vmem:[%s3 + $0x590] sm:$0xff]
  %v527 = vld [vmem:[%s3 + $0x598] sm:$0xff]
  %v528 = vld [vmem:[%s3 + $0x5a0] sm:$0xff]
  %v529 = vld [vmem:[%s3 + $0x5a8] sm:$0xff]
  %v530 = vld [vmem:[%s3 + $0x5b0] sm:$0xff]
  %v531 = vld [vmem:[%s3 + $0x5b8] sm:$0xff]
  %v532 = vld [vmem:[%s3 + $0x5c0] sm:$0xff]
  %v533 = vld [vmem:[%s3 + $0x5c8] sm:$0xff]
  %v534 = vld [vmem:[%s3 + $0x5d0] sm:$0xff]
  %v535 = vld [vmem:[%s3 + $0x5d8] sm:$0xff]
  %v536 = vld [vmem:[%s3 + $0x5e0] sm:$0xff]
  %v537 = vld [vmem:[%s3 + $0x5e8] sm:$0xff]
  %v538 = vld [vmem:[%s3 + $0x5f0] sm:$0xff]
  %v539 = vld [vmem:[%s3 + $0x5f8] sm:$0xff]
  %v540 = vld [vmem:[%s4] sm:$0x7]
  %v542 = vlaneseq
  %v543 = vshrl.u32 %v542, 7
  %v544 = vsub.s32 0, %v543
  %v545 = vrot.slane %v540, %v544
  %v546 = vlaneseq
  %v547 = vshrl.u32 %v546, 7
  %v548 = vsub.s32 1, %v547
  %v549 = vrot.slane %v540, %v548
  %v550 = vlaneseq
  %v551 = vshrl.u32 %v550, 7
  %v552 = vsub.s32 2, %v551
  %v553 = vrot.slane %v540, %v552
  %557 = vmatprep.subr.mxu0 %v349
  %558 = vmatpush1.msra.mxu0 %v348
  %559 = vmatprep.subr.mxu0 %v352
  %560 = vmatpush1.msra.mxu0 %v351
  %561 = vmatprep.subr.mxu0 %v355
  %562 = vmatpush1.msra.mxu0 %v354
  %563 = vmatprep.subr.mxu0 %v358
  %564 = vmatpush1.msra.mxu0 %v357
  %565 = vmatprep.subr.mxu0 %v361
  %566 = vmatpush1.msra.mxu0 %v360
  %567 = vmatprep.subr.mxu0 %v364
  %568 = vmatpush1.msra.mxu0 %v363
  %569 = vmatprep.subr.mxu0 %v367
  %570 = vmatpush1.msra.mxu0 %v366
  %571 = vmatprep.subr.mxu0 %v370
  %572 = vmatpush1.msra.mxu0 %v369
  %573 = vmatprep.subr.mxu0 %v373
  %574 = vmatpush1.msra.mxu0 %v372
  %575 = vmatprep.subr.mxu0 %v376
  %576 = vmatpush1.msra.mxu0 %v375
  %577 = vmatprep.subr.mxu0 %v379
  %578 = vmatpush1.msra.mxu0 %v378
  %579 = vmatprep.subr.mxu0 %v382
  %580 = vmatpush1.msra.mxu0 %v381
  %581 = vmatprep.subr.mxu0 %v385
  %582 = vmatpush1.msra.mxu0 %v384
  %583 = vmatprep.subr.mxu0 %v388
  %584 = vmatpush1.msra.mxu0 %v387
  %585 = vmatprep.subr.mxu0 %v391
  %586 = vmatpush1.msra.mxu0 %v390
  %587 = vmatprep.subr.mxu0 %v394
  %588 = vmatpush1.msra.mxu0 %v393
  %589 = vmatprep.subr.mxu0 %v397
  %590 = vmatpush1.msra.mxu0 %v396
  %591 = vmatprep.subr.mxu0 %v400
  %592 = vmatpush1.msra.mxu0 %v399
  %593 = vmatprep.subr.mxu0 %v403
  %594 = vmatpush1.msra.mxu0 %v402
  %595 = vmatprep.subr.mxu0 %v406
  %596 = vmatpush1.msra.mxu0 %v405
  %597 = vmatprep.subr.mxu0 %v409
  %598 = vmatpush1.msra.mxu0 %v408
  %599 = vmatprep.subr.mxu0 %v412
  %600 = vmatpush1.msra.mxu0 %v411
  %601 = vmatprep.subr.mxu0 %v415
  %602 = vmatpush1.msra.mxu0 %v414
  %603 = vmatprep.subr.mxu0 %v418
  %604 = vmatpush1.msra.mxu0 %v417
  %605 = vmatprep.subr.mxu0 %v421
  %606 = vmatpush1.msra.mxu0 %v420
  %607 = vmatprep.subr.mxu0 %v424
  %608 = vmatpush1.msra.mxu0 %v423
  %609 = vmatprep.subr.mxu0 %v427
  %610 = vmatpush1.msra.mxu0 %v426
  %611 = vmatprep.subr.mxu0 %v430
  %612 = vmatpush1.msra.mxu0 %v429
  %613 = vmatprep.subr.mxu0 %v433
  %614 = vmatpush1.msra.mxu0 %v432
  %615 = vmatprep.subr.mxu0 %v436
  %616 = vmatpush1.msra.mxu0 %v435
  %617 = vmatprep.subr.mxu0 %v439
  %618 = vmatpush1.msra.mxu0 %v438
  %619 = vmatprep.subr.mxu0 %v442
  %620 = vmatpush1.msra.mxu0 %v441
  %621 = vmatprep.mubr.f32.mxu0 %v345
  %622 = vmatmul.mubr.f32.gmra.mrb[0].mxu0 %v344
  %v623 = vpop.f32.mrb[0].mxu0
  %v624 = vadd.f32 %v545, %v623
  %v625 = vpop.f32.mrb[0].mxu0
  %v626 = vadd.f32 %v549, %v625
  %627 = vdwg.mxu0
  %628 = vmatprep.subr.mxu0 %v445
  %629 = vmatpush1.msra.mxu0 %v444
  %630 = vmatprep.subr.mxu0 %v448
  %631 = vmatpush1.msra.mxu0 %v447
  %632 = vmatprep.subr.mxu0 %v451
  %633 = vmatpush1.msra.mxu0 %v450
  %634 = vmatprep.subr.mxu0 %v454
  %635 = vmatpush1.msra.mxu0 %v453
  %636 = vmatprep.subr.mxu0 %v457
  %637 = vmatpush1.msra.mxu0 %v456
  %638 = vmatprep.subr.mxu0 %v460
  %639 = vmatpush1.msra.mxu0 %v459
  %640 = vmatprep.subr.mxu0 %v463
  %641 = vmatpush1.msra.mxu0 %v462
  %642 = vmatprep.subr.mxu0 %v466
  %643 = vmatpush1.msra.mxu0 %v465
  %644 = vmatprep.subr.mxu0 %v469
  %645 = vmatpush1.msra.mxu0 %v468
  %646 = vmatprep.subr.mxu0 %v472
  %647 = vmatpush1.msra.mxu0 %v471
  %648 = vmatprep.subr.mxu0 %v475
  %649 = vmatpush1.msra.mxu0 %v474
  %650 = vmatprep.subr.mxu0 %v478
  %651 = vmatpush1.msra.mxu0 %v477
  %652 = vmatprep.subr.mxu0 %v481
  %653 = vmatpush1.msra.mxu0 %v480
  %654 = vmatprep.subr.mxu0 %v484
  %655 = vmatpush1.msra.mxu0 %v483
  %656 = vmatprep.subr.mxu0 %v487
  %657 = vmatpush1.msra.mxu0 %v486
  %658 = vmatprep.subr.mxu0 %v490
  %659 = vmatpush1.msra.mxu0 %v489
  %660 = vmatprep.subr.mxu0 %v493
  %661 = vmatpush1.msra.mxu0 %v492
  %662 = vmatprep.subr.mxu0 %v496
  %663 = vmatpush1.msra.mxu0 %v495
  %664 = vmatprep.subr.mxu0 %v499
  %665 = vmatpush1.msra.mxu0 %v498
  %666 = vmatprep.subr.mxu0 %v502
  %667 = vmatpush1.msra.mxu0 %v501
  %668 = vmatprep.subr.mxu0 %v505
  %669 = vmatpush1.msra.mxu0 %v504
  %670 = vmatprep.subr.mxu0 %v508
  %671 = vmatpush1.msra.mxu0 %v507
  %672 = vmatprep.subr.mxu0 %v511
  %673 = vmatpush1.msra.mxu0 %v510
  %674 = vmatprep.subr.mxu0 %v514
  %675 = vmatpush1.msra.mxu0 %v513
  %676 = vmatprep.subr.mxu0 %v517
  %677 = vmatpush1.msra.mxu0 %v516
  %678 = vmatprep.subr.mxu0 %v520
  %679 = vmatpush1.msra.mxu0 %v519
  %680 = vmatprep.subr.mxu0 %v523
  %681 = vmatpush1.msra.mxu0 %v522
  %682 = vmatprep.subr.mxu0 %v526
  %683 = vmatpush1.msra.mxu0 %v525
  %684 = vmatprep.subr.mxu0 %v529
  %685 = vmatpush1.msra.mxu0 %v528
  %686 = vmatprep.subr.mxu0 %v532
  %687 = vmatpush1.msra.mxu0 %v531
  %688 = vmatprep.subr.mxu0 %v535
  %689 = vmatpush1.msra.mxu0 %v534
  %690 = vmatprep.subr.mxu0 %v538
  %691 = vmatpush1.msra.mxu0 %v537
  %692 = vmatprep.mubr.f32.mxu0 %v347
  %693 = vmatmul.mubr.f32.gmra.mrb[0].mxu0 %v346
  %v694 = vpop.f32.mrb[0].mxu0
  %v695 = vadd.f32 %v624, %v694
  %v696 = vpop.f32.mrb[0].mxu0
  %v697 = vadd.f32 %v626, %v696
  %698 = vdwg.mxu0
  %699 = vmatprep.subr.mxu0 0.0
  %700 = vmatpush1.msra.mxu0 %v350
  %701 = vmatprep.subr.mxu0 0.0
  %702 = vmatpush1.msra.mxu0 %v353
  %703 = vmatprep.subr.mxu0 0.0
  %704 = vmatpush1.msra.mxu0 %v356
  %705 = vmatprep.subr.mxu0 0.0
  %706 = vmatpush1.msra.mxu0 %v359
  %707 = vmatprep.subr.mxu0 0.0
  %708 = vmatpush1.msra.mxu0 %v362
  %709 = vmatprep.subr.mxu0 0.0
  %710 = vmatpush1.msra.mxu0 %v365
  %711 = vmatprep.subr.mxu0 0.0
  %712 = vmatpush1.msra.mxu0 %v368
  %713 = vmatprep.subr.mxu0 0.0
  %714 = vmatpush1.msra.mxu0 %v371
  %715 = vmatprep.subr.mxu0 0.0
  %716 = vmatpush1.msra.mxu0 %v374
  %717 = vmatprep.subr.mxu0 0.0
  %718 = vmatpush1.msra.mxu0 %v377
  %719 = vmatprep.subr.mxu0 0.0
  %720 = vmatpush1.msra.mxu0 %v380
  %721 = vmatprep.subr.mxu0 0.0
  %722 = vmatpush1.msra.mxu0 %v383
  %723 = vmatprep.subr.mxu0 0.0
  %724 = vmatpush1.msra.mxu0 %v386
  %725 = vmatprep.subr.mxu0 0.0
  %726 = vmatpush1.msra.mxu0 %v389
  %727 = vmatprep.subr.mxu0 0.0
  %728 = vmatpush1.msra.mxu0 %v392
  %729 = vmatprep.subr.mxu0 0.0
  %730 = vmatpush1.msra.mxu0 %v395
  %731 = vmatprep.subr.mxu0 0.0
  %732 = vmatpush1.msra.mxu0 %v398
  %733 = vmatprep.subr.mxu0 0.0
  %734 = vmatpush1.msra.mxu0 %v401
  %735 = vmatprep.subr.mxu0 0.0
  %736 = vmatpush1.msra.mxu0 %v404
  %737 = vmatprep.subr.mxu0 0.0
  %738 = vmatpush1.msra.mxu0 %v407
  %739 = vmatprep.subr.mxu0 0.0
  %740 = vmatpush1.msra.mxu0 %v410
  %741 = vmatprep.subr.mxu0 0.0
  %742 = vmatpush1.msra.mxu0 %v413
  %743 = vmatprep.subr.mxu0 0.0
  %744 = vmatpush1.msra.mxu0 %v416
  %745 = vmatprep.subr.mxu0 0.0
  %746 = vmatpush1.msra.mxu0 %v419
  %747 = vmatprep.subr.mxu0 0.0
  %748 = vmatpush1.msra.mxu0 %v422
  %749 = vmatprep.subr.mxu0 0.0
  %750 = vmatpush1.msra.mxu0 %v425
  %751 = vmatprep.subr.mxu0 0.0
  %752 = vmatpush1.msra.mxu0 %v428
  %753 = vmatprep.subr.mxu0 0.0
  %754 = vmatpush1.msra.mxu0 %v431
  %755 = vmatprep.subr.mxu0 0.0
  %756 = vmatpush1.msra.mxu0 %v434
  %757 = vmatprep.subr.mxu0 0.0
  %758 = vmatpush1.msra.mxu0 %v437
  %759 = vmatprep.subr.mxu0 0.0
  %760 = vmatpush1.msra.mxu0 %v440
  %761 = vmatprep.subr.mxu0 0.0
  %762 = vmatpush1.msra.mxu0 %v443
  %763 = vmatprep.mubr.f32.mxu0 %v345
  %764 = vmatmul.mubr.f32.gmra.mrb[0].mxu0 %v344
  %v765 = vpop.f32.mrb[0].mxu0
  %v766 = vadd.f32 %v553, %v765
  %v767 = vpop.f32.mrb[0].mxu0
  %768 = vdwg.mxu0
  %769 = vmatprep.subr.mxu0 0.0
  %770 = vmatpush1.msra.mxu0 %v446
  %771 = vmatprep.subr.mxu0 0.0
  %772 = vmatpush1.msra.mxu0 %v449
  %773 = vmatprep.subr.mxu0 0.0
  %774 = vmatpush1.msra.mxu0 %v452
  %775 = vmatprep.subr.mxu0 0.0
  %776 = vmatpush1.msra.mxu0 %v455
  %777 = vmatprep.subr.mxu0 0.0
  %778 = vmatpush1.msra.mxu0 %v458
  %779 = vmatprep.subr.mxu0 0.0
  %780 = vmatpush1.msra.mxu0 %v461
  %781 = vmatprep.subr.mxu0 0.0
  %782 = vmatpush1.msra.mxu0 %v464
  %783 = vmatprep.subr.mxu0 0.0
  %784 = vmatpush1.msra.mxu0 %v467
  %785 = vmatprep.subr.mxu0 0.0
  %786 = vmatpush1.msra.mxu0 %v470
  %787 = vmatprep.subr.mxu0 0.0
  %788 = vmatpush1.msra.mxu0 %v473
  %789 = vmatprep.subr.mxu0 0.0
  %790 = vmatpush1.msra.mxu0 %v476
  %791 = vmatprep.subr.mxu0 0.0
  %792 = vmatpush1.msra.mxu0 %v479
  %793 = vmatprep.subr.mxu0 0.0
  %794 = vmatpush1.msra.mxu0 %v482
  %795 = vmatprep.subr.mxu0 0.0
  %796 = vmatpush1.msra.mxu0 %v485
  %797 = vmatprep.subr.mxu0 0.0
  %798 = vmatpush1.msra.mxu0 %v488
  %799 = vmatprep.subr.mxu0 0.0
  %800 = vmatpush1.msra.mxu0 %v491
  %801 = vmatprep.subr.mxu0 0.0
  %802 = vmatpush1.msra.mxu0 %v494
  %803 = vmatprep.subr.mxu0 0.0
  %804 = vmatpush1.msra.mxu0 %v497
  %805 = vmatprep.subr.mxu0 0.0
  %806 = vmatpush1.msra.mxu0 %v500
  %807 = vmatprep.subr.mxu0 0.0
  %808 = vmatpush1.msra.mxu0 %v503
  %809 = vmatprep.subr.mxu0 0.0
  %810 = vmatpush1.msra.mxu0 %v506
  %811 = vmatprep.subr.mxu0 0.0
  %812 = vmatpush1.msra.mxu0 %v509
  %813 = vmatprep.subr.mxu0 0.0
  %814 = vmatpush1.msra.mxu0 %v512
  %815 = vmatprep.subr.mxu0 0.0
  %816 = vmatpush1.msra.mxu0 %v515
  %817 = vmatprep.subr.mxu0 0.0
  %818 = vmatpush1.msra.mxu0 %v518
  %819 = vmatprep.subr.mxu0 0.0
  %820 = vmatpush1.msra.mxu0 %v521
  %821 = vmatprep.subr.mxu0 0.0
  %822 = vmatpush1.msra.mxu0 %v524
  %823 = vmatprep.subr.mxu0 0.0
  %824 = vmatpush1.msra.mxu0 %v527
  %825 = vmatprep.subr.mxu0 0.0
  %826 = vmatpush1.msra.mxu0 %v530
  %827 = vmatprep.subr.mxu0 0.0
  %828 = vmatpush1.msra.mxu0 %v533
  %829 = vmatprep.subr.mxu0 0.0
  %830 = vmatpush1.msra.mxu0 %v536
  %831 = vmatprep.subr.mxu0 0.0
  %832 = vmatpush1.msra.mxu0 %v539
  %833 = vmatprep.mubr.f32.mxu0 %v347
  %834 = vmatmul.mubr.f32.gmra.mrb[0].mxu0 %v346
  %v835 = vpop.f32.mrb[0].mxu0
  %v836 = vadd.f32 %v766, %v835
  %v837 = vpop.f32.mrb[0].mxu0
  %838 = vdwg.mxu0
  %vm839 = vcmp.ge.f32.partialorder %v695, 0.0
  %vm840 = vcmp.ge.f32.partialorder %v697, 0.0
  %vm841 = vcmp.ge.f32.partialorder %v836, 0.0
  %v842 = vmul.f32 %v695, 0.05
  %v843 = vmul.f32 %v697, 0.05
  %v844 = vmul.f32 %v836, 0.05
  %v845 = vsel %vm839, %v695, %v842
  %v846 = vsel %vm840, %v697, %v843
  %v847 = vsel %vm841, %v836, %v844
  %v848 = vld [vmem:[%s5] sm:$0xff]
  %v849 = vld [vmem:[%s5 + $0x8] sm:$0xff]
  %v850 = vld [vmem:[%s5 + $0x10] sm:$0xff]
  %v851 = vld [vmem:[%s5 + $0x18] sm:$0xff]
  %v852 = vld [vmem:[%s5 + $0x20] sm:$0xff]
  %v853 = vld [vmem:[%s5 + $0x28] sm:$0xff]
  %v854 = vld [vmem:[%s5 + $0x30] sm:$0xff]
  %v855 = vld [vmem:[%s5 + $0x38] sm:$0xff]
  %v856 = vld [vmem:[%s5 + $0x40] sm:$0xff]
  %v857 = vld [vmem:[%s5 + $0x48] sm:$0xff]
  %v858 = vld [vmem:[%s5 + $0x50] sm:$0xff]
  %v859 = vld [vmem:[%s5 + $0x58] sm:$0xff]
  %v860 = vld [vmem:[%s5 + $0x60] sm:$0xff]
  %v861 = vld [vmem:[%s5 + $0x68] sm:$0xff]
  %v862 = vld [vmem:[%s5 + $0x70] sm:$0xff]
  %v863 = vld [vmem:[%s5 + $0x78] sm:$0xff]
  %v864 = vld [vmem:[%s5 + $0x80] sm:$0xff]
  %v865 = vld [vmem:[%s5 + $0x88] sm:$0xff]
  %v866 = vld [vmem:[%s5 + $0x90] sm:$0xff]
  %v867 = vld [vmem:[%s5 + $0x98] sm:$0xff]
  %v868 = vld [vmem:[%s5 + $0xa0] sm:$0xff]
  %v869 = vld [vmem:[%s5 + $0xa8] sm:$0xff]
  %v870 = vld [vmem:[%s5 + $0xb0] sm:$0xff]
  %v871 = vld [vmem:[%s5 + $0xb8] sm:$0xff]
  %v872 = vld [vmem:[%s5 + $0xc0] sm:$0xff]
  %v873 = vld [vmem:[%s5 + $0xc8] sm:$0xff]
  %v874 = vld [vmem:[%s5 + $0xd0] sm:$0xff]
  %v875 = vld [vmem:[%s5 + $0xd8] sm:$0xff]
  %v876 = vld [vmem:[%s5 + $0xe0] sm:$0xff]
  %v877 = vld [vmem:[%s5 + $0xe8] sm:$0xff]
  %v878 = vld [vmem:[%s5 + $0xf0] sm:$0xff]
  %v879 = vld [vmem:[%s5 + $0xf8] sm:$0xff]
  %v880 = vld [vmem:[%s5 + $0x100] sm:$0xff]
  %v881 = vld [vmem:[%s5 + $0x108] sm:$0xff]
  %v882 = vld [vmem:[%s5 + $0x110] sm:$0xff]
  %v883 = vld [vmem:[%s5 + $0x118] sm:$0xff]
  %v884 = vld [vmem:[%s5 + $0x120] sm:$0xff]
  %v885 = vld [vmem:[%s5 + $0x128] sm:$0xff]
  %v886 = vld [vmem:[%s5 + $0x130] sm:$0xff]
  %v887 = vld [vmem:[%s5 + $0x138] sm:$0xff]
  %v888 = vld [vmem:[%s5 + $0x140] sm:$0xff]
  %v889 = vld [vmem:[%s5 + $0x148] sm:$0xff]
  %v890 = vld [vmem:[%s5 + $0x150] sm:$0xff]
  %v891 = vld [vmem:[%s5 + $0x158] sm:$0xff]
  %v892 = vld [vmem:[%s5 + $0x160] sm:$0xff]
  %v893 = vld [vmem:[%s5 + $0x168] sm:$0xff]
  %v894 = vld [vmem:[%s5 + $0x170] sm:$0xff]
  %v895 = vld [vmem:[%s5 + $0x178] sm:$0xff]
  %v896 = vld [vmem:[%s5 + $0x180] sm:$0xff]
  %v897 = vld [vmem:[%s5 + $0x188] sm:$0xff]
  %v898 = vld [vmem:[%s5 + $0x190] sm:$0xff]
  %v899 = vld [vmem:[%s5 + $0x198] sm:$0xff]
  %v900 = vld [vmem:[%s5 + $0x1a0] sm:$0xff]
  %v901 = vld [vmem:[%s5 + $0x1a8] sm:$0xff]
  %v902 = vld [vmem:[%s5 + $0x1b0] sm:$0xff]
  %v903 = vld [vmem:[%s5 + $0x1b8] sm:$0xff]
  %v904 = vld [vmem:[%s5 + $0x1c0] sm:$0xff]
  %v905 = vld [vmem:[%s5 + $0x1c8] sm:$0xff]
  %v906 = vld [vmem:[%s5 + $0x1d0] sm:$0xff]
  %v907 = vld [vmem:[%s5 + $0x1d8] sm:$0xff]
  %v908 = vld [vmem:[%s5 + $0x1e0] sm:$0xff]
  %v909 = vld [vmem:[%s5 + $0x1e8] sm:$0xff]
  %v910 = vld [vmem:[%s5 + $0x1f0] sm:$0xff]
  %v911 = vld [vmem:[%s5 + $0x1f8] sm:$0xff]
  %v912 = vld [vmem:[%s5 + $0x200] sm:$0xff]
  %v913 = vld [vmem:[%s5 + $0x208] sm:$0xff]
  %v914 = vld [vmem:[%s5 + $0x210] sm:$0xff]
  %v915 = vld [vmem:[%s5 + $0x218] sm:$0xff]
  %v916 = vld [vmem:[%s5 + $0x220] sm:$0xff]
  %v917 = vld [vmem:[%s5 + $0x228] sm:$0xff]
  %v918 = vld [vmem:[%s5 + $0x230] sm:$0xff]
  %v919 = vld [vmem:[%s5 + $0x238] sm:$0xff]
  %v920 = vld [vmem:[%s5 + $0x240] sm:$0xff]
  %v921 = vld [vmem:[%s5 + $0x248] sm:$0xff]
  %v922 = vld [vmem:[%s5 + $0x250] sm:$0xff]
  %v923 = vld [vmem:[%s5 + $0x258] sm:$0xff]
  %v924 = vld [vmem:[%s5 + $0x260] sm:$0xff]
  %v925 = vld [vmem:[%s5 + $0x268] sm:$0xff]
  %v926 = vld [vmem:[%s5 + $0x270] sm:$0xff]
  %v927 = vld [vmem:[%s5 + $0x278] sm:$0xff]
  %v928 = vld [vmem:[%s5 + $0x280] sm:$0xff]
  %v929 = vld [vmem:[%s5 + $0x288] sm:$0xff]
  %v930 = vld [vmem:[%s5 + $0x290] sm:$0xff]
  %v931 = vld [vmem:[%s5 + $0x298] sm:$0xff]
  %v932 = vld [vmem:[%s5 + $0x2a0] sm:$0xff]
  %v933 = vld [vmem:[%s5 + $0x2a8] sm:$0xff]
  %v934 = vld [vmem:[%s5 + $0x2b0] sm:$0xff]
  %v935 = vld [vmem:[%s5 + $0x2b8] sm:$0xff]
  %v936 = vld [vmem:[%s5 + $0x2c0] sm:$0xff]
  %v937 = vld [vmem:[%s5 + $0x2c8] sm:$0xff]
  %v938 = vld [vmem:[%s5 + $0x2d0] sm:$0xff]
  %v939 = vld [vmem:[%s5 + $0x2d8] sm:$0xff]
  %v940 = vld [vmem:[%s5 + $0x2e0] sm:$0xff]
  %v941 = vld [vmem:[%s5 + $0x2e8] sm:$0xff]
  %v942 = vld [vmem:[%s5 + $0x2f0] sm:$0xff]
  %v943 = vld [vmem:[%s5 + $0x2f8] sm:$0xff]
  %v944 = vld [vmem:[%s6] sm:$0x3]
  %v946 = vlaneseq
  %v947 = vshrl.u32 %v946, 7
  %v948 = vsub.s32 0, %v947
  %v949 = vrot.slane %v944, %v948
  %v950 = vlaneseq
  %v951 = vshrl.u32 %v950, 7
  %v952 = vsub.s32 1, %v951
  %v953 = vrot.slane %v944, %v952
  %956 = vmatprep.subr.mxu0 %v849
  %957 = vmatpush1.msra.mxu0 %v848
  %958 = vmatprep.subr.mxu0 %v851
  %959 = vmatpush1.msra.mxu0 %v850
  %960 = vmatprep.subr.mxu0 %v853
  %961 = vmatpush1.msra.mxu0 %v852
  %962 = vmatprep.subr.mxu0 %v855
  %963 = vmatpush1.msra.mxu0 %v854
  %964 = vmatprep.subr.mxu0 %v857
  %965 = vmatpush1.msra.mxu0 %v856
  %966 = vmatprep.subr.mxu0 %v859
  %967 = vmatpush1.msra.mxu0 %v858
  %968 = vmatprep.subr.mxu0 %v861
  %969 = vmatpush1.msra.mxu0 %v860
  %970 = vmatprep.subr.mxu0 %v863
  %971 = vmatpush1.msra.mxu0 %v862
  %972 = vmatprep.subr.mxu0 %v865
  %973 = vmatpush1.msra.mxu0 %v864
  %974 = vmatprep.subr.mxu0 %v867
  %975 = vmatpush1.msra.mxu0 %v866
  %976 = vmatprep.subr.mxu0 %v869
  %977 = vmatpush1.msra.mxu0 %v868
  %978 = vmatprep.subr.mxu0 %v871
  %979 = vmatpush1.msra.mxu0 %v870
  %980 = vmatprep.subr.mxu0 %v873
  %981 = vmatpush1.msra.mxu0 %v872
  %982 = vmatprep.subr.mxu0 %v875
  %983 = vmatpush1.msra.mxu0 %v874
  %984 = vmatprep.subr.mxu0 %v877
  %985 = vmatpush1.msra.mxu0 %v876
  %986 = vmatprep.subr.mxu0 %v879
  %987 = vmatpush1.msra.mxu0 %v878
  %988 = vmatprep.subr.mxu0 %v881
  %989 = vmatpush1.msra.mxu0 %v880
  %990 = vmatprep.subr.mxu0 %v883
  %991 = vmatpush1.msra.mxu0 %v882
  %992 = vmatprep.subr.mxu0 %v885
  %993 = vmatpush1.msra.mxu0 %v884
  %994 = vmatprep.subr.mxu0 %v887
  %995 = vmatpush1.msra.mxu0 %v886
  %996 = vmatprep.subr.mxu0 %v889
  %997 = vmatpush1.msra.mxu0 %v888
  %998 = vmatprep.subr.mxu0 %v891
  %999 = vmatpush1.msra.mxu0 %v890
  %1000 = vmatprep.subr.mxu0 %v893
  %1001 = vmatpush1.msra.mxu0 %v892
  %1002 = vmatprep.subr.mxu0 %v895
  %1003 = vmatpush1.msra.mxu0 %v894
  %1004 = vmatprep.subr.mxu0 %v897
  %1005 = vmatpush1.msra.mxu0 %v896
  %1006 = vmatprep.subr.mxu0 %v899
  %1007 = vmatpush1.msra.mxu0 %v898
  %1008 = vmatprep.subr.mxu0 %v901
  %1009 = vmatpush1.msra.mxu0 %v900
  %1010 = vmatprep.subr.mxu0 %v903
  %1011 = vmatpush1.msra.mxu0 %v902
  %1012 = vmatprep.subr.mxu0 %v905
  %1013 = vmatpush1.msra.mxu0 %v904
  %1014 = vmatprep.subr.mxu0 %v907
  %1015 = vmatpush1.msra.mxu0 %v906
  %1016 = vmatprep.subr.mxu0 %v909
  %1017 = vmatpush1.msra.mxu0 %v908
  %1018 = vmatprep.subr.mxu0 %v911
  %1019 = vmatpush1.msra.mxu0 %v910
  %1020 = vmatprep.mubr.f32.mxu0 %v846
  %1021 = vmatmul.mubr.f32.gmra.mrb[0].mxu0 %v845
  %v1022 = vpop.f32.mrb[0].mxu0
  %v1023 = vadd.f32 %v949, %v1022
  %v1024 = vpop.f32.mrb[0].mxu0
  %v1025 = vadd.f32 %v953, %v1024
  %1026 = vdwg.mxu0
  %1027 = vmatprep.subr.mxu0 %v913
  %1028 = vmatpush1.msra.mxu0 %v912
  %1029 = vmatprep.subr.mxu0 %v915
  %1030 = vmatpush1.msra.mxu0 %v914
  %1031 = vmatprep.subr.mxu0 %v917
  %1032 = vmatpush1.msra.mxu0 %v916
  %1033 = vmatprep.subr.mxu0 %v919
  %1034 = vmatpush1.msra.mxu0 %v918
  %1035 = vmatprep.subr.mxu0 %v921
  %1036 = vmatpush1.msra.mxu0 %v920
  %1037 = vmatprep.subr.mxu0 %v923
  %1038 = vmatpush1.msra.mxu0 %v922
  %1039 = vmatprep.subr.mxu0 %v925
  %1040 = vmatpush1.msra.mxu0 %v924
  %1041 = vmatprep.subr.mxu0 %v927
  %1042 = vmatpush1.msra.mxu0 %v926
  %1043 = vmatprep.subr.mxu0 %v929
  %1044 = vmatpush1.msra.mxu0 %v928
  %1045 = vmatprep.subr.mxu0 %v931
  %1046 = vmatpush1.msra.mxu0 %v930
  %1047 = vmatprep.subr.mxu0 %v933
  %1048 = vmatpush1.msra.mxu0 %v932
  %1049 = vmatprep.subr.mxu0 %v935
  %1050 = vmatpush1.msra.mxu0 %v934
  %1051 = vmatprep.subr.mxu0 %v937
  %1052 = vmatpush1.msra.mxu0 %v936
  %1053 = vmatprep.subr.mxu0 %v939
  %1054 = vmatpush1.msra.mxu0 %v938
  %1055 = vmatprep.subr.mxu0 %v941
  %1056 = vmatpush1.msra.mxu0 %v940
  %1057 = vmatprep.subr.mxu0 %v943
  %1058 = vmatpush1.msra.mxu0 %v942
  %1059 = vmatprep.subr.mxu0 0.0
  %1060 = vmatpush1.msra.mxu0 0.0
  %1061 = vmatprep.subr.mxu0 0.0
  %1062 = vmatpush1.msra.mxu0 0.0
  %1063 = vmatprep.subr.mxu0 0.0
  %1064 = vmatpush1.msra.mxu0 0.0
  %1065 = vmatprep.subr.mxu0 0.0
  %1066 = vmatpush1.msra.mxu0 0.0
  %1067 = vmatprep.subr.mxu0 0.0
  %1068 = vmatpush1.msra.mxu0 0.0
  %1069 = vmatprep.subr.mxu0 0.0
  %1070 = vmatpush1.msra.mxu0 0.0
  %1071 = vmatprep.subr.mxu0 0.0
  %1072 = vmatpush1.msra.mxu0 0.0
  %1073 = vmatprep.subr.mxu0 0.0
  %1074 = vmatpush1.msra.mxu0 0.0
  %1075 = vmatprep.subr.mxu0 0.0
  %1076 = vmatpush1.msra.mxu0 0.0
  %1077 = vmatprep.subr.mxu0 0.0
  %1078 = vmatpush1.msra.mxu0 0.0
  %1079 = vmatprep.subr.mxu0 0.0
  %1080 = vmatpush1.msra.mxu0 0.0
  %1081 = vmatprep.subr.mxu0 0.0
  %1082 = vmatpush1.msra.mxu0 0.0
  %1083 = vmatprep.subr.mxu0 0.0
  %1084 = vmatpush1.msra.mxu0 0.0
  %1085 = vmatprep.subr.mxu0 0.0
  %1086 = vmatpush1.msra.mxu0 0.0
  %1087 = vmatprep.subr.mxu0 0.0
  %1088 = vmatpush1.msra.mxu0 0.0
  %1089 = vmatprep.subr.mxu0 0.0
  %1090 = vmatpush1.msra.mxu0 0.0
  %1091 = vmatprep.mubr.f32.mxu0 0.0
  %1092 = vmatmul.mubr.f32.gmra.mrb[0].mxu0 %v847
  %v1093 = vpop.f32.mrb[0].mxu0
  %v1094 = vadd.f32 %v1023, %v1093
  %v1095 = vpop.f32.mrb[0].mxu0
  %v1096 = vadd.f32 %v1025, %v1095
  %1097 = vdwg.mxu0
  %vm1098 = vcmp.ge.f32.partialorder %v1094, 0.0
  %vm1099 = vcmp.ge.f32.partialorder %v1096, 0.0
  %v1100 = vmul.f32 %v1094, 0.05
  %v1101 = vmul.f32 %v1096, 0.05
  %v1102 = vsel %vm1098, %v1094, %v1100
  %v1103 = vsel %vm1099, %v1096, %v1101
  %v1104 = vld [vmem:[%s7] sm:$0xff]
  %v1105 = vld [vmem:[%s7 + $0x8] sm:$0xff]
  %v1106 = vld [vmem:[%s7 + $0x10] sm:$0xff]
  %v1107 = vld [vmem:[%s7 + $0x18] sm:$0xff]
  %v1108 = vld [vmem:[%s7 + $0x20] sm:$0xff]
  %v1109 = vld [vmem:[%s7 + $0x28] sm:$0xff]
  %v1110 = vld [vmem:[%s7 + $0x30] sm:$0xff]
  %v1111 = vld [vmem:[%s7 + $0x38] sm:$0xff]
  %v1112 = vld [vmem:[%s7 + $0x40] sm:$0xff]
  %v1113 = vld [vmem:[%s7 + $0x48] sm:$0xff]
  %v1114 = vld [vmem:[%s7 + $0x50] sm:$0xff]
  %v1115 = vld [vmem:[%s7 + $0x58] sm:$0xff]
  %v1116 = vld [vmem:[%s7 + $0x60] sm:$0xff]
  %v1117 = vld [vmem:[%s7 + $0x68] sm:$0xff]
  %v1118 = vld [vmem:[%s7 + $0x70] sm:$0xff]
  %v1119 = vld [vmem:[%s7 + $0x78] sm:$0xff]
  %v1120 = vld [vmem:[%s7 + $0x80] sm:$0xff]
  %v1121 = vld [vmem:[%s7 + $0x88] sm:$0xff]
  %v1122 = vld [vmem:[%s7 + $0x90] sm:$0xff]
  %v1123 = vld [vmem:[%s7 + $0x98] sm:$0xff]
  %v1124 = vld [vmem:[%s7 + $0xa0] sm:$0xff]
  %v1125 = vld [vmem:[%s7 + $0xa8] sm:$0xff]
  %v1126 = vld [vmem:[%s7 + $0xb0] sm:$0xff]
  %v1127 = vld [vmem:[%s7 + $0xb8] sm:$0xff]
  %v1128 = vld [vmem:[%s7 + $0xc0] sm:$0xff]
  %v1129 = vld [vmem:[%s7 + $0xc8] sm:$0xff]
  %v1130 = vld [vmem:[%s7 + $0xd0] sm:$0xff]
  %v1131 = vld [vmem:[%s7 + $0xd8] sm:$0xff]
  %v1132 = vld [vmem:[%s7 + $0xe0] sm:$0xff]
  %v1133 = vld [vmem:[%s7 + $0xe8] sm:$0xff]
  %v1134 = vld [vmem:[%s7 + $0xf0] sm:$0xff]
  %v1135 = vld [vmem:[%s7 + $0xf8] sm:$0xff]
  %v1136 = vld [vmem:[%s8] sm:$0x1]
  %v1138 = vlaneseq
  %v1139 = vshrl.u32 %v1138, 7
  %v1140 = vsub.s32 0, %v1139
  %v1141 = vrot.slane %v1136, %v1140
  %1143 = vmatprep.subr.mxu0 0.0
  %1144 = vmatpush1.msra.mxu0 %v1104
  %1145 = vmatprep.subr.mxu0 0.0
  %1146 = vmatpush1.msra.mxu0 %v1105
  %1147 = vmatprep.subr.mxu0 0.0
  %1148 = vmatpush1.msra.mxu0 %v1106
  %1149 = vmatprep.subr.mxu0 0.0
  %1150 = vmatpush1.msra.mxu0 %v1107
  %1151 = vmatprep.subr.mxu0 0.0
  %1152 = vmatpush1.msra.mxu0 %v1108
  %1153 = vmatprep.subr.mxu0 0.0
  %1154 = vmatpush1.msra.mxu0 %v1109
  %1155 = vmatprep.subr.mxu0 0.0
  %1156 = vmatpush1.msra.mxu0 %v1110
  %1157 = vmatprep.subr.mxu0 0.0
  %1158 = vmatpush1.msra.mxu0 %v1111
  %1159 = vmatprep.subr.mxu0 0.0
  %1160 = vmatpush1.msra.mxu0 %v1112
  %1161 = vmatprep.subr.mxu0 0.0
  %1162 = vmatpush1.msra.mxu0 %v1113
  %1163 = vmatprep.subr.mxu0 0.0
  %1164 = vmatpush1.msra.mxu0 %v1114
  %1165 = vmatprep.subr.mxu0 0.0
  %1166 = vmatpush1.msra.mxu0 %v1115
  %1167 = vmatprep.subr.mxu0 0.0
  %1168 = vmatpush1.msra.mxu0 %v1116
  %1169 = vmatprep.subr.mxu0 0.0
  %1170 = vmatpush1.msra.mxu0 %v1117
  %1171 = vmatprep.subr.mxu0 0.0
  %1172 = vmatpush1.msra.mxu0 %v1118
  %1173 = vmatprep.subr.mxu0 0.0
  %1174 = vmatpush1.msra.mxu0 %v1119
  %1175 = vmatprep.subr.mxu0 0.0
  %1176 = vmatpush1.msra.mxu0 %v1120
  %1177 = vmatprep.subr.mxu0 0.0
  %1178 = vmatpush1.msra.mxu0 %v1121
  %1179 = vmatprep.subr.mxu0 0.0
  %1180 = vmatpush1.msra.mxu0 %v1122
  %1181 = vmatprep.subr.mxu0 0.0
  %1182 = vmatpush1.msra.mxu0 %v1123
  %1183 = vmatprep.subr.mxu0 0.0
  %1184 = vmatpush1.msra.mxu0 %v1124
  %1185 = vmatprep.subr.mxu0 0.0
  %1186 = vmatpush1.msra.mxu0 %v1125
  %1187 = vmatprep.subr.mxu0 0.0
  %1188 = vmatpush1.msra.mxu0 %v1126
  %1189 = vmatprep.subr.mxu0 0.0
  %1190 = vmatpush1.msra.mxu0 %v1127
  %1191 = vmatprep.subr.mxu0 0.0
  %1192 = vmatpush1.msra.mxu0 %v1128
  %1193 = vmatprep.subr.mxu0 0.0
  %1194 = vmatpush1.msra.mxu0 %v1129
  %1195 = vmatprep.subr.mxu0 0.0
  %1196 = vmatpush1.msra.mxu0 %v1130
  %1197 = vmatprep.subr.mxu0 0.0
  %1198 = vmatpush1.msra.mxu0 %v1131
  %1199 = vmatprep.subr.mxu0 0.0
  %1200 = vmatpush1.msra.mxu0 %v1132
  %1201 = vmatprep.subr.mxu0 0.0
  %1202 = vmatpush1.msra.mxu0 %v1133
  %1203 = vmatprep.subr.mxu0 0.0
  %1204 = vmatpush1.msra.mxu0 %v1134
  %1205 = vmatprep.subr.mxu0 0.0
  %1206 = vmatpush1.msra.mxu0 %v1135
  %1207 = vmatprep.mubr.f32.mxu0 %v1103
  %1208 = vmatmul.mubr.f32.gmra.mrb[0].mxu0 %v1102
  %v1209 = vpop.f32.mrb[0].mxu0
  %v1210 = vadd.f32 %v1141, %v1209
  %v1211 = vpop.f32.mrb[0].mxu0
  %1212 = vdwg.mxu0
  %1213 = vst [vmem:[%s9] sm:$0x3] %v1210
  // Predicated region
  $region38: #{fully_connect_modul_300_forward.1} parent=0 // pred_check
    _
  $region39: #{fully_connect_modul_300_forward.1} parent=0 // pred_check_branch
    %1215 = sbr.rel (0) target = $region41
  $region40: #{fully_connect_modul_300_forward.1} parent=0 // pred_region
    _
  $region41: #{fully_connect_modul_300_forward.1} parent=0 // pred_fallthru
    _
  // Predicated region
  $region42: #{fully_connect_modul_300_forward.1} parent=0 // pred_check
    _
  $region43: #{fully_connect_modul_300_forward.1} parent=0 // pred_check_branch
    %1217 = sbr.rel (0) target = $region45
  $region44: #{fully_connect_modul_300_forward.1} parent=0 // pred_region
    _
  $region45: #{fully_connect_modul_300_forward.1} parent=0 // pred_fallthru
    _

</llo_original>
